<compile_context>
chip_gen: v5e
topology: v5e:2x2
jax: 0.10.0
libtpu: 0.0.40
codegen_flags: <defaults>
</compile_context>

<pallas_src>
import numpy as np
import jax
import jax.numpy as jnp
from jax.experimental import pallas as pl
from jax.experimental.pallas import tpu as pltpu


def _g_lane_mask(shape, H):
    """Boolean mask over the last dim: True on the 'g' (cell-candidate) gate lanes of each
    4H-wide gate block (gate order i,f,g,o), False on the i/f/o lanes.  Built from iota +
    compares so it lowers to cheap splat/iota constants."""
    lane = jax.lax.broadcasted_iota(jnp.int32, shape, len(shape) - 1)
    is_g = None
    for k in range(shape[-1] // (4 * H)):
        lo = k * 4 * H + 2 * H
        blk = (lane >= lo) & (lane < lo + H)
        is_g = blk if is_g is None else (is_g | blk)
    return is_g


def make_kernel(B, T, V, E, H, O):
    """Fused 2-layer NextCharacterLSTM forward.

    Refs (in order):
      ids   (T*B, 1) i32   time-major: row t*B+b holds ids[b, t]
      emb_w (V, E)   f32
      wx0   (E, 4H)  f32   layer-0 input weights (gate order i,f,g,o)
      b0    (1, 4H)  f32   layer-0 bias (b_ih + b_hh)
      w_f   (2H, 8H) f32   fused [[wh0, wx1],[0, wh1]]
      b1    (1, 4H)  f32   layer-1 bias
      dec_w (H, O)   f32
      dec_b (1, O)   f32
      out   (T*B, O) f32   output (time-major rows)
      hseq  (T*B, H) f32   VMEM scratch for the top-layer h's
    """
    TB = T * B

    def kernel(ids_ref, emb_w_ref, wx0_ref, b0_ref, wf_ref, b1_ref,
               dec_w_ref, dec_b_ref, out_ref, hseq_ref):
        f32 = jnp.float32

        # ---------------- Prologue (off the recurrence critical path) ----------------
        # Embedding: one-hot built directly in (TB, V) orientation -> no XLU transpose,
        # then ONE flat f32 MXU matmul (one-hot rows select f32 table rows exactly).
        ids = ids_ref[...]                                               # (TB, 1) i32
        v_iota = jax.lax.broadcasted_iota(jnp.int32, (TB, V), 1)         # (TB, V)
        one_hot = (v_iota == ids).astype(f32)                            # (TB, V)
        emb = jnp.dot(one_hot, emb_w_ref[...], preferred_element_type=f32)   # (TB, E)

        # sigmoid(x) = 0.5*tanh(0.5x) + 0.5  -> pre-scale the i/f/o gate columns by 0.5
        # ONCE here (folded into weights / biases), so the time loop only needs a single
        # full-width tanh plus a lane-constant mul/add per cell.
        s_xg = jnp.where(_g_lane_mask((TB, 4 * H), H), 1.0, 0.5).astype(f32)
        s_wf = jnp.where(_g_lane_mask((2 * H, 8 * H), H), 1.0, 0.5).astype(f32)
        g_b = _g_lane_mask((B, 4 * H), H)
        mul_b = jnp.where(g_b, 1.0, 0.5).astype(f32)                     # post-tanh scale
        off_b = jnp.where(g_b, 0.0, 0.5).astype(f32)                     # post-tanh offset

        # Hoisted layer-0 input projection for ALL T steps: one flat matmul (+bias, +scale).
        xg0 = (jnp.dot(emb, wx0_ref[...], preferred_element_type=f32)
               + b0_ref[...]) * s_xg                                     # (TB, 4H)
        wf = wf_ref[...] * s_wf                                          # (2H, 8H), pre-scaled
        b1_b = jnp.broadcast_to(b1_ref[...], (B, 4 * H)) * mul_b         # (B, 4H), pre-scaled

        def lstm_cell(gates_scaled, c):
            # gates_scaled: i/f/o lanes hold 0.5*x, g lanes hold x (x = raw pre-activation)
            a = jnp.tanh(gates_scaled) * mul_b + off_b                   # i/f/o->sigmoid, g->tanh
            i_g, f_g = a[:, 0:H], a[:, H:2 * H]
            g_g, o_g = a[:, 2 * H:3 * H], a[:, 3 * H:4 * H]
            c_new = f_g * c + i_g * g_g
            h_new = o_g * jnp.tanh(c_new)
            return h_new, c_new

        # ------------- Fused wavefront recurrence (fully unrolled, all f32) -----------
        h0 = jnp.zeros((B, H), f32); c0 = jnp.zeros((B, H), f32)
        h1 = jnp.zeros((B, H), f32); c1 = jnp.zeros((B, H), f32)
        r0 = jnp.zeros((B, 4 * H), f32)              # h0(t-1) @ wh0 (pre-scaled); 0 at t=0

        for t in range(T):                           # static slices -> scheduler visibility
            # layer 0, time t
            h0, c0 = lstm_cell(xg0[t * B:(t + 1) * B, :] + r0, c0)
            # ONE fused MXU push: [h0(t), h1(t-1)] @ [[wh0, wx1],[0, wh1]]
            #   cols 0:4H  = layer-0 recurrent term for step t+1
            #   cols 4H:8H = layer-1 full gate pre-activation at time t
            fused = jnp.dot(jnp.concatenate([h0, h1], axis=1), wf,
                            preferred_element_type=f32)                  # (B, 8H)
            r0 = fused[:, 0:4 * H]
            # layer 1, time t
            h1, c1 = lstm_cell(fused[:, 4 * H:8 * H] + b1_b, c1)
            hseq_ref[t * B:(t + 1) * B, :] = h1       # stash top-layer h (static row store)

        # ---------------- Decoder: one flat (TB,H)@(H,O) matmul ----------------------
        # TODO(synk): if O/V grow toward a real vocab, make the output lane-dense
        # (O a multiple of 128) and switch the one-hot embedding to a DMA/scalar gather.
        out_ref[...] = (jnp.dot(hseq_ref[...], dec_w_ref[...], preferred_element_type=f32)
                        + dec_b_ref[...])

    return kernel


def next_char_lstm_pallas(ids, P, *, V, E, H, O, L):
    """ids: (B, T) int32.  Returns (B, O, T) f32, matching PyTorch output.permute(0, 2, 1)."""
    # TODO(synk): the wavefront fusion below is written for n_layers == 2 (the module
    # config); deeper stacks need a per-layer time skew (fill/drain) in the fused loop.
    assert L == 2, "fused wavefront kernel is specialized to n_layers == 2"
    B, T = ids.shape
    TB = T * B
    # time-major flat ids column: ids_col[t*B + b, 0] = ids[b, t]
    ids_col = jnp.transpose(ids, (1, 0)).reshape(TB, 1).astype(jnp.int32)

    # Fused recurrent weight (pure concatenation of the given weights, no numeric change):
    #   [h0(t), h1(t-1)] @ [[wh0, wx1],[0, wh1]] -> [h0@wh0 , h0@wx1 + h1@wh1]
    w_fused = jnp.concatenate(
        [jnp.concatenate([P['wh0'], P['wx1']], axis=1),
         jnp.concatenate([jnp.zeros((H, 4 * H), jnp.float32), P['wh1']], axis=1)],
        axis=0).astype(jnp.float32)                                      # (2H, 8H)

    inputs = [ids_col,
              P['emb'].astype(jnp.float32),
              P['wx0'].astype(jnp.float32),
              P['b0'].astype(jnp.float32),
              w_fused,
              P['b1'].astype(jnp.float32),
              P['dec_w'].astype(jnp.float32),
              P['dec_b'].astype(jnp.float32)]

    kernel = make_kernel(B, T, V, E, H, O)

    out2d = pl.pallas_call(
        kernel,
        out_shape=jax.ShapeDtypeStruct((TB, O), jnp.float32),
        in_specs=[pl.BlockSpec(memory_space=pltpu.MemorySpace.VMEM) for _ in inputs],
        out_specs=pl.BlockSpec(memory_space=pltpu.MemorySpace.VMEM),
        scratch_shapes=[pltpu.VMEM((TB, H), jnp.float32)],
    )(*inputs)

    # (T*B, O) time-major -> (B, O, T) == PyTorch output.permute(0, 2, 1)
    return jnp.transpose(out2d.reshape(T, B, O), (1, 2, 0))


def reference_forward(ids, P, *, H, L):
    """Pure-JAX f32 reference matching PyTorch NextCharacterLSTM.forward semantics."""
    x = P['emb'][ids]                                                    # (B, T, E)
    B = x.shape[0]
    h_in = x
    for l in range(L):
        wx, wh, b = P[f'wx{l}'], P[f'wh{l}'], P[f'b{l}']

        def step(carry, x_t):
            h, c = carry
            g = x_t @ wx + h @ wh + b
            i = jax.nn.sigmoid(g[:, 0:H])
            f = jax.nn.sigmoid(g[:, H:2 * H])
            gg = jnp.tanh(g[:, 2 * H:3 * H])
            o = jax.nn.sigmoid(g[:, 3 * H:4 * H])
            c = f * c + i * gg
            h = o * jnp.tanh(c)
            return (h, c), h

        init = (jnp.zeros((B, H), jnp.float32), jnp.zeros((B, H), jnp.float32))
        _, hs = jax.lax.scan(step, init, jnp.transpose(h_in, (1, 0, 2)))
        h_in = jnp.transpose(hs, (1, 0, 2))                              # (B, T, H)
    logits = h_in @ P['dec_w'] + P['dec_b']                              # (B, T, O)
    return jnp.transpose(logits, (0, 2, 1))                              # (B, O, T)


def init_params(key, V, E, H, O, L):
    """Deterministic synthetic parameters (shapes match nn.Embedding/nn.LSTM/nn.Linear).
    LSTM weights pre-transposed; b = b_ih + b_hh (exactly what PyTorch adds)."""
    P = {}
    keys = jax.random.split(key, 2 + L)
    scale = 1.0 / np.sqrt(H)
    P['emb'] = jax.random.normal(keys[0], (V, E), jnp.float32)
    for l in range(L):
        in_dim = E if l == 0 else H
        k1, k2, k3, k4 = jax.random.split(keys[1 + l], 4)
        w_ih = jax.random.uniform(k1, (4 * H, in_dim), jnp.float32, -scale, scale)
        w_hh = jax.random.uniform(k2, (4 * H, H), jnp.float32, -scale, scale)
        b_ih = jax.random.uniform(k3, (4 * H,), jnp.float32, -scale, scale)
        b_hh = jax.random.uniform(k4, (4 * H,), jnp.float32, -scale, scale)
        P[f'wx{l}'] = w_ih.T                                             # (in_dim, 4H)
        P[f'wh{l}'] = w_hh.T                                             # (H, 4H)
        P[f'b{l}'] = (b_ih + b_hh)[None, :]                              # (1, 4H)
    kd1, kd2 = jax.random.split(keys[1 + L], 2)
    dec_w = jax.random.uniform(kd1, (O, H), jnp.float32, -scale, scale)
    dec_b = jax.random.uniform(kd2, (O,), jnp.float32, -scale, scale)
    P['dec_w'] = dec_w.T                                                 # (H, O)
    P['dec_b'] = dec_b[None, :]                                          # (1, O)
    return P


if __name__ == "__main__":
    # Small shapes consistent with the module: vocab=32, embed=32, hidden=32,
    # output=32, n_layers=2, batch=2, seq=8.
    V, E, H, O, L = 32, 32, 32, 32, 2
    B, T = 2, 8

    key = jax.random.PRNGKey(0)
    k_ids, k_par = jax.random.split(key)
    ids = jax.random.randint(k_ids, (B, T), 0, V, dtype=jnp.int32)       # (B, T)
    P = init_params(k_par, V, E, H, O, L)

    out = next_char_lstm_pallas(ids, P, V=V, E=E, H=H, O=O, L=L)
    out = jax.block_until_ready(out)                                     # (B, O, T)

    ref = jax.block_until_ready(reference_forward(ids, P, H=H, L=L))
    assert out.shape == (B, O, T), out.shape
    # All-f32 kernel (tanh-based sigmoid identity is exact); tolerance covers any
    # MXU-internal rounding of the f32 matmuls.
    if not jnp.allclose(out, ref, atol=2e-2, rtol=2e-2):
        raise AssertionError("Pallas kernel output mismatch vs JAX reference")

    print("KERNEL_OK")
</pallas_src>

<mosaic_0001>
module attributes {stable_mosaic.version = 11 : i64} {
  func.func @kernel(%arg0: memref<16x1xi32, #tpu.memory_space<vmem>>, %arg1: memref<32x32xf32, #tpu.memory_space<vmem>>, %arg2: memref<32x128xf32, #tpu.memory_space<vmem>>, %arg3: memref<1x128xf32, #tpu.memory_space<vmem>>, %arg4: memref<64x256xf32, #tpu.memory_space<vmem>>, %arg5: memref<1x128xf32, #tpu.memory_space<vmem>>, %arg6: memref<32x32xf32, #tpu.memory_space<vmem>>, %arg7: memref<1x32xf32, #tpu.memory_space<vmem>>, %arg8: memref<16x32xf32, #tpu.memory_space<vmem>>, %arg9: memref<16x32xf32, #tpu.memory_space<vmem>>) attributes {dimension_semantics = [], scalar_prefetch = 0 : i64, scratch_operands = 1 : i64, tpu.core_type = #tpu.core_type<tc>} {
    %c0 = arith.constant 0 : index
    %c0_0 = arith.constant 0 : index
    %0 = vector.load %arg0[%c0, %c0_0] : memref<16x1xi32, #tpu.memory_space<vmem>>, vector<16x1xi32>
    %1 = tpu.iota {dimensions = array<i32: 1>} : vector<16x32xi32>
    %2 = vector.broadcast %0 : vector<16x1xi32> to vector<16x32xi32>
    %3 = arith.cmpi eq, %1, %2 : vector<16x32xi32>
    %4 = arith.extui %3 : vector<16x32xi1> to vector<16x32xi32>
    %5 = arith.sitofp %4 : vector<16x32xi32> to vector<16x32xf32>
    %c0_1 = arith.constant 0 : index
    %c0_2 = arith.constant 0 : index
    %6 = vector.load %arg1[%c0_1, %c0_2] : memref<32x32xf32, #tpu.memory_space<vmem>>, vector<32x32xf32>
    %cst = arith.constant dense<0.000000e+00> : vector<16x32xf32>
    %7 = tpu.matmul %5, %6, %cst {dimension_numbers = #tpu.dot_dimension_numbers<[1], [0], [0], [1], [0, 0, 1, 1], [], []>} : vector<16x32xf32>, vector<32x32xf32>, vector<16x32xf32> -> vector<16x32xf32>
    %8 = tpu.iota {dimensions = array<i32: 1>} : vector<16x128xi32>
    %c64_i32 = arith.constant 64 : i32
    %9 = vector.broadcast %c64_i32 : i32 to vector<16x128xi32>
    %10 = arith.cmpi sge, %8, %9 : vector<16x128xi32>
    %c96_i32 = arith.constant 96 : i32
    %11 = vector.broadcast %c96_i32 : i32 to vector<16x128xi32>
    %12 = arith.cmpi slt, %8, %11 : vector<16x128xi32>
    %13 = arith.andi %10, %12 : vector<16x128xi1>
    %cst_3 = arith.constant 1.000000e+00 : f32
    %cst_4 = arith.constant 5.000000e-01 : f32
    %14 = vector.broadcast %cst_3 : f32 to vector<16x128xf32>
    %15 = vector.broadcast %cst_4 : f32 to vector<16x128xf32>
    %16 = arith.select %13, %14, %15 : vector<16x128xi1>, vector<16x128xf32>
    %17 = tpu.iota {dimensions = array<i32: 1>} : vector<64x256xi32>
    %c64_i32_5 = arith.constant 64 : i32
    %18 = vector.broadcast %c64_i32_5 : i32 to vector<64x256xi32>
    %19 = arith.cmpi sge, %17, %18 : vector<64x256xi32>
    %c96_i32_6 = arith.constant 96 : i32
    %20 = vector.broadcast %c96_i32_6 : i32 to vector<64x256xi32>
    %21 = arith.cmpi slt, %17, %20 : vector<64x256xi32>
    %22 = arith.andi %19, %21 : vector<64x256xi1>
    %c192_i32 = arith.constant 192 : i32
    %23 = vector.broadcast %c192_i32 : i32 to vector<64x256xi32>
    %24 = arith.cmpi sge, %17, %23 : vector<64x256xi32>
    %c224_i32 = arith.constant 224 : i32
    %25 = vector.broadcast %c224_i32 : i32 to vector<64x256xi32>
    %26 = arith.cmpi slt, %17, %25 : vector<64x256xi32>
    %27 = arith.andi %24, %26 : vector<64x256xi1>
    %28 = arith.ori %22, %27 : vector<64x256xi1>
    %cst_7 = arith.constant 1.000000e+00 : f32
    %cst_8 = arith.constant 5.000000e-01 : f32
    %29 = vector.broadcast %cst_7 : f32 to vector<64x256xf32>
    %30 = vector.broadcast %cst_8 : f32 to vector<64x256xf32>
    %31 = arith.select %28, %29, %30 : vector<64x256xi1>, vector<64x256xf32>
    %32 = tpu.iota {dimensions = array<i32: 1>} : vector<2x128xi32>
    %c64_i32_9 = arith.constant 64 : i32
    %33 = vector.broadcast %c64_i32_9 : i32 to vector<2x128xi32>
    %34 = arith.cmpi sge, %32, %33 : vector<2x128xi32>
    %c96_i32_10 = arith.constant 96 : i32
    %35 = vector.broadcast %c96_i32_10 : i32 to vector<2x128xi32>
    %36 = arith.cmpi slt, %32, %35 : vector<2x128xi32>
    %37 = arith.andi %34, %36 : vector<2x128xi1>
    %cst_11 = arith.constant 1.000000e+00 : f32
    %cst_12 = arith.constant 5.000000e-01 : f32
    %38 = vector.broadcast %cst_11 : f32 to vector<2x128xf32>
    %39 = vector.broadcast %cst_12 : f32 to vector<2x128xf32>
    %40 = arith.select %37, %38, %39 : vector<2x128xi1>, vector<2x128xf32>
    %cst_13 = arith.constant 0.000000e+00 : f32
    %cst_14 = arith.constant 5.000000e-01 : f32
    %41 = vector.broadcast %cst_13 : f32 to vector<2x128xf32>
    %42 = vector.broadcast %cst_14 : f32 to vector<2x128xf32>
    %43 = arith.select %37, %41, %42 : vector<2x128xi1>, vector<2x128xf32>
    %c0_15 = arith.constant 0 : index
    %c0_16 = arith.constant 0 : index
    %44 = vector.load %arg2[%c0_15, %c0_16] : memref<32x128xf32, #tpu.memory_space<vmem>>, vector<32x128xf32>
    %cst_17 = arith.constant dense<0.000000e+00> : vector<16x128xf32>
    %45 = tpu.matmul %7, %44, %cst_17 {dimension_numbers = #tpu.dot_dimension_numbers<[1], [0], [0], [1], [0, 0, 1, 1], [], []>} : vector<16x32xf32>, vector<32x128xf32>, vector<16x128xf32> -> vector<16x128xf32>
    %c0_18 = arith.constant 0 : index
    %c0_19 = arith.constant 0 : index
    %46 = vector.load %arg3[%c0_18, %c0_19] : memref<1x128xf32, #tpu.memory_space<vmem>>, vector<1x128xf32>
    %47 = vector.broadcast %46 : vector<1x128xf32> to vector<16x128xf32>
    %48 = arith.addf %45, %47 : vector<16x128xf32>
    %49 = arith.mulf %48, %16 : vector<16x128xf32>
    %c0_20 = arith.constant 0 : index
    %c0_21 = arith.constant 0 : index
    %50 = vector.load %arg4[%c0_20, %c0_21] : memref<64x256xf32, #tpu.memory_space<vmem>>, vector<64x256xf32>
    %51 = arith.mulf %50, %31 : vector<64x256xf32>
    %c0_22 = arith.constant 0 : index
    %c0_23 = arith.constant 0 : index
    %52 = vector.load %arg5[%c0_22, %c0_23] : memref<1x128xf32, #tpu.memory_space<vmem>>, vector<1x128xf32>
    %53 = vector.shape_cast %52 : vector<1x128xf32> to vector<1x128xf32>
    %54 = vector.broadcast %53 : vector<1x128xf32> to vector<2x128xf32>
    %55 = arith.mulf %54, %40 : vector<2x128xf32>
    %cst_24 = arith.constant 0.000000e+00 : f32
    %56 = vector.broadcast %cst_24 : f32 to vector<2x32xf32>
    %cst_25 = arith.constant 0.000000e+00 : f32
    %57 = vector.broadcast %cst_25 : f32 to vector<2x32xf32>
    %cst_26 = arith.constant 0.000000e+00 : f32
    %58 = vector.broadcast %cst_26 : f32 to vector<2x32xf32>
    %cst_27 = arith.constant 0.000000e+00 : f32
    %59 = vector.broadcast %cst_27 : f32 to vector<2x128xf32>
    %60 = vector.extract_strided_slice %49 {offsets = [0, 0], sizes = [2, 128], strides = [1, 1]} : vector<16x128xf32> to vector<2x128xf32>
    %61 = arith.addf %60, %59 : vector<2x128xf32>
    %62 = math.tanh %61 : vector<2x128xf32>
    %63 = arith.mulf %62, %40 : vector<2x128xf32>
    %64 = arith.addf %63, %43 : vector<2x128xf32>
    %65 = vector.extract_strided_slice %64 {offsets = [0, 0], sizes = [2, 32], strides = [1, 1]} : vector<2x128xf32> to vector<2x32xf32>
    %66 = vector.extract_strided_slice %64 {offsets = [0, 32], sizes = [2, 32], strides = [1, 1]} : vector<2x128xf32> to vector<2x32xf32>
    %67 = vector.extract_strided_slice %64 {offsets = [0, 64], sizes = [2, 32], strides = [1, 1]} : vector<2x128xf32> to vector<2x32xf32>
    %68 = vector.extract_strided_slice %64 {offsets = [0, 96], sizes = [2, 32], strides = [1, 1]} : vector<2x128xf32> to vector<2x32xf32>
    %69 = arith.mulf %66, %56 : vector<2x32xf32>
    %70 = arith.mulf %65, %67 : vector<2x32xf32>
    %71 = arith.addf %69, %70 : vector<2x32xf32>
    %72 = math.tanh %71 : vector<2x32xf32>
    %73 = arith.mulf %68, %72 : vector<2x32xf32>
    %74 = tpu.concatenate %73, %57 in 1 : vector<2x32xf32>, vector<2x32xf32> -> vector<2x64xf32>
    %cst_28 = arith.constant dense<0.000000e+00> : vector<2x256xf32>
    %75 = tpu.matmul %74, %51, %cst_28 {dimension_numbers = #tpu.dot_dimension_numbers<[1], [0], [0], [1], [0, 0, 1, 1], [], []>} : vector<2x64xf32>, vector<64x256xf32>, vector<2x256xf32> -> vector<2x256xf32>
    %76 = vector.extract_strided_slice %75 {offsets = [0, 0], sizes = [2, 128], strides = [1, 1]} : vector<2x256xf32> to vector<2x128xf32>
    %77 = vector.extract_strided_slice %75 {offsets = [0, 128], sizes = [2, 128], strides = [1, 1]} : vector<2x256xf32> to vector<2x128xf32>
    %78 = arith.addf %77, %55 : vector<2x128xf32>
    %79 = math.tanh %78 : vector<2x128xf32>
    %80 = arith.mulf %79, %40 : vector<2x128xf32>
    %81 = arith.addf %80, %43 : vector<2x128xf32>
    %82 = vector.extract_strided_slice %81 {offsets = [0, 0], sizes = [2, 32], strides = [1, 1]} : vector<2x128xf32> to vector<2x32xf32>
    %83 = vector.extract_strided_slice %81 {offsets = [0, 32], sizes = [2, 32], strides = [1, 1]} : vector<2x128xf32> to vector<2x32xf32>
    %84 = vector.extract_strided_slice %81 {offsets = [0, 64], sizes = [2, 32], strides = [1, 1]} : vector<2x128xf32> to vector<2x32xf32>
    %85 = vector.extract_strided_slice %81 {offsets = [0, 96], sizes = [2, 32], strides = [1, 1]} : vector<2x128xf32> to vector<2x32xf32>
    %86 = arith.mulf %83, %58 : vector<2x32xf32>
    %87 = arith.mulf %82, %84 : vector<2x32xf32>
    %88 = arith.addf %86, %87 : vector<2x32xf32>
    %89 = math.tanh %88 : vector<2x32xf32>
    %90 = arith.mulf %85, %89 : vector<2x32xf32>
    %c0_29 = arith.constant 0 : index
    %c0_30 = arith.constant 0 : index
    %91 = vector.load %arg9[%c0_29, %c0_30] : memref<16x32xf32, #tpu.memory_space<vmem>>, vector<2x32xf32>
    tpu.vector_store %arg9[%c0_29, %c0_30], %90 {strides = array<i32>} : memref<16x32xf32, #tpu.memory_space<vmem>>, vector<2x32xf32>,
    %92 = vector.extract_strided_slice %49 {offsets = [2, 0], sizes = [2, 128], strides = [1, 1]} : vector<16x128xf32> to vector<2x128xf32>
    %93 = arith.addf %92, %76 : vector<2x128xf32>
    %94 = math.tanh %93 : vector<2x128xf32>
    %95 = arith.mulf %94, %40 : vector<2x128xf32>
    %96 = arith.addf %95, %43 : vector<2x128xf32>
    %97 = vector.extract_strided_slice %96 {offsets = [0, 0], sizes = [2, 32], strides = [1, 1]} : vector<2x128xf32> to vector<2x32xf32>
    %98 = vector.extract_strided_slice %96 {offsets = [0, 32], sizes = [2, 32], strides = [1, 1]} : vector<2x128xf32> to vector<2x32xf32>
    %99 = vector.extract_strided_slice %96 {offsets = [0, 64], sizes = [2, 32], strides = [1, 1]} : vector<2x128xf32> to vector<2x32xf32>
    %100 = vector.extract_strided_slice %96 {offsets = [0, 96], sizes = [2, 32], strides = [1, 1]} : vector<2x128xf32> to vector<2x32xf32>
    %101 = arith.mulf %98, %71 : vector<2x32xf32>
    %102 = arith.mulf %97, %99 : vector<2x32xf32>
    %103 = arith.addf %101, %102 : vector<2x32xf32>
    %104 = math.tanh %103 : vector<2x32xf32>
    %105 = arith.mulf %100, %104 : vector<2x32xf32>
    %106 = tpu.concatenate %105, %90 in 1 : vector<2x32xf32>, vector<2x32xf32> -> vector<2x64xf32>
    %cst_31 = arith.constant dense<0.000000e+00> : vector<2x256xf32>
    %107 = tpu.matmul %106, %51, %cst_31 {dimension_numbers = #tpu.dot_dimension_numbers<[1], [0], [0], [1], [0, 0, 1, 1], [], []>} : vector<2x64xf32>, vector<64x256xf32>, vector<2x256xf32> -> vector<2x256xf32>
    %108 = vector.extract_strided_slice %107 {offsets = [0, 0], sizes = [2, 128], strides = [1, 1]} : vector<2x256xf32> to vector<2x128xf32>
    %109 = vector.extract_strided_slice %107 {offsets = [0, 128], sizes = [2, 128], strides = [1, 1]} : vector<2x256xf32> to vector<2x128xf32>
    %110 = arith.addf %109, %55 : vector<2x128xf32>
    %111 = math.tanh %110 : vector<2x128xf32>
    %112 = arith.mulf %111, %40 : vector<2x128xf32>
    %113 = arith.addf %112, %43 : vector<2x128xf32>
    %114 = vector.extract_strided_slice %113 {offsets = [0, 0], sizes = [2, 32], strides = [1, 1]} : vector<2x128xf32> to vector<2x32xf32>
    %115 = vector.extract_strided_slice %113 {offsets = [0, 32], sizes = [2, 32], strides = [1, 1]} : vector<2x128xf32> to vector<2x32xf32>
    %116 = vector.extract_strided_slice %113 {offsets = [0, 64], sizes = [2, 32], strides = [1, 1]} : vector<2x128xf32> to vector<2x32xf32>
    %117 = vector.extract_strided_slice %113 {offsets = [0, 96], sizes = [2, 32], strides = [1, 1]} : vector<2x128xf32> to vector<2x32xf32>
    %118 = arith.mulf %115, %88 : vector<2x32xf32>
    %119 = arith.mulf %114, %116 : vector<2x32xf32>
    %120 = arith.addf %118, %119 : vector<2x32xf32>
    %121 = math.tanh %120 : vector<2x32xf32>
    %122 = arith.mulf %117, %121 : vector<2x32xf32>
    %c2 = arith.constant 2 : index
    %c0_32 = arith.constant 0 : index
    %123 = vector.load %arg9[%c2, %c0_32] : memref<16x32xf32, #tpu.memory_space<vmem>>, vector<2x32xf32>
    tpu.vector_store %arg9[%c2, %c0_32], %122 {strides = array<i32>} : memref<16x32xf32, #tpu.memory_space<vmem>>, vector<2x32xf32>,
    %124 = vector.extract_strided_slice %49 {offsets = [4, 0], sizes = [2, 128], strides = [1, 1]} : vector<16x128xf32> to vector<2x128xf32>
    %125 = arith.addf %124, %108 : vector<2x128xf32>
    %126 = math.tanh %125 : vector<2x128xf32>
    %127 = arith.mulf %126, %40 : vector<2x128xf32>
    %128 = arith.addf %127, %43 : vector<2x128xf32>
    %129 = vector.extract_strided_slice %128 {offsets = [0, 0], sizes = [2, 32], strides = [1, 1]} : vector<2x128xf32> to vector<2x32xf32>
    %130 = vector.extract_strided_slice %128 {offsets = [0, 32], sizes = [2, 32], strides = [1, 1]} : vector<2x128xf32> to vector<2x32xf32>
    %131 = vector.extract_strided_slice %128 {offsets = [0, 64], sizes = [2, 32], strides = [1, 1]} : vector<2x128xf32> to vector<2x32xf32>
    %132 = vector.extract_strided_slice %128 {offsets = [0, 96], sizes = [2, 32], strides = [1, 1]} : vector<2x128xf32> to vector<2x32xf32>
    %133 = arith.mulf %130, %103 : vector<2x32xf32>
    %134 = arith.mulf %129, %131 : vector<2x32xf32>
    %135 = arith.addf %133, %134 : vector<2x32xf32>
    %136 = math.tanh %135 : vector<2x32xf32>
    %137 = arith.mulf %132, %136 : vector<2x32xf32>
    %138 = tpu.concatenate %137, %122 in 1 : vector<2x32xf32>, vector<2x32xf32> -> vector<2x64xf32>
    %cst_33 = arith.constant dense<0.000000e+00> : vector<2x256xf32>
    %139 = tpu.matmul %138, %51, %cst_33 {dimension_numbers = #tpu.dot_dimension_numbers<[1], [0], [0], [1], [0, 0, 1, 1], [], []>} : vector<2x64xf32>, vector<64x256xf32>, vector<2x256xf32> -> vector<2x256xf32>
    %140 = vector.extract_strided_slice %139 {offsets = [0, 0], sizes = [2, 128], strides = [1, 1]} : vector<2x256xf32> to vector<2x128xf32>
    %141 = vector.extract_strided_slice %139 {offsets = [0, 128], sizes = [2, 128], strides = [1, 1]} : vector<2x256xf32> to vector<2x128xf32>
    %142 = arith.addf %141, %55 : vector<2x128xf32>
    %143 = math.tanh %142 : vector<2x128xf32>
    %144 = arith.mulf %143, %40 : vector<2x128xf32>
    %145 = arith.addf %144, %43 : vector<2x128xf32>
    %146 = vector.extract_strided_slice %145 {offsets = [0, 0], sizes = [2, 32], strides = [1, 1]} : vector<2x128xf32> to vector<2x32xf32>
    %147 = vector.extract_strided_slice %145 {offsets = [0, 32], sizes = [2, 32], strides = [1, 1]} : vector<2x128xf32> to vector<2x32xf32>
    %148 = vector.extract_strided_slice %145 {offsets = [0, 64], sizes = [2, 32], strides = [1, 1]} : vector<2x128xf32> to vector<2x32xf32>
    %149 = vector.extract_strided_slice %145 {offsets = [0, 96], sizes = [2, 32], strides = [1, 1]} : vector<2x128xf32> to vector<2x32xf32>
    %150 = arith.mulf %147, %120 : vector<2x32xf32>
    %151 = arith.mulf %146, %148 : vector<2x32xf32>
    %152 = arith.addf %150, %151 : vector<2x32xf32>
    %153 = math.tanh %152 : vector<2x32xf32>
    %154 = arith.mulf %149, %153 : vector<2x32xf32>
    %c4 = arith.constant 4 : index
    %c0_34 = arith.constant 0 : index
    %155 = vector.load %arg9[%c4, %c0_34] : memref<16x32xf32, #tpu.memory_space<vmem>>, vector<2x32xf32>
    tpu.vector_store %arg9[%c4, %c0_34], %154 {strides = array<i32>} : memref<16x32xf32, #tpu.memory_space<vmem>>, vector<2x32xf32>,
    %156 = vector.extract_strided_slice %49 {offsets = [6, 0], sizes = [2, 128], strides = [1, 1]} : vector<16x128xf32> to vector<2x128xf32>
    %157 = arith.addf %156, %140 : vector<2x128xf32>
    %158 = math.tanh %157 : vector<2x128xf32>
    %159 = arith.mulf %158, %40 : vector<2x128xf32>
    %160 = arith.addf %159, %43 : vector<2x128xf32>
    %161 = vector.extract_strided_slice %160 {offsets = [0, 0], sizes = [2, 32], strides = [1, 1]} : vector<2x128xf32> to vector<2x32xf32>
    %162 = vector.extract_strided_slice %160 {offsets = [0, 32], sizes = [2, 32], strides = [1, 1]} : vector<2x128xf32> to vector<2x32xf32>
    %163 = vector.extract_strided_slice %160 {offsets = [0, 64], sizes = [2, 32], strides = [1, 1]} : vector<2x128xf32> to vector<2x32xf32>
    %164 = vector.extract_strided_slice %160 {offsets = [0, 96], sizes = [2, 32], strides = [1, 1]} : vector<2x128xf32> to vector<2x32xf32>
    %165 = arith.mulf %162, %135 : vector<2x32xf32>
    %166 = arith.mulf %161, %163 : vector<2x32xf32>
    %167 = arith.addf %165, %166 : vector<2x32xf32>
    %168 = math.tanh %167 : vector<2x32xf32>
    %169 = arith.mulf %164, %168 : vector<2x32xf32>
    %170 = tpu.concatenate %169, %154 in 1 : vector<2x32xf32>, vector<2x32xf32> -> vector<2x64xf32>
    %cst_35 = arith.constant dense<0.000000e+00> : vector<2x256xf32>
    %171 = tpu.matmul %170, %51, %cst_35 {dimension_numbers = #tpu.dot_dimension_numbers<[1], [0], [0], [1], [0, 0, 1, 1], [], []>} : vector<2x64xf32>, vector<64x256xf32>, vector<2x256xf32> -> vector<2x256xf32>
    %172 = vector.extract_strided_slice %171 {offsets = [0, 0], sizes = [2, 128], strides = [1, 1]} : vector<2x256xf32> to vector<2x128xf32>
    %173 = vector.extract_strided_slice %171 {offsets = [0, 128], sizes = [2, 128], strides = [1, 1]} : vector<2x256xf32> to vector<2x128xf32>
    %174 = arith.addf %173, %55 : vector<2x128xf32>
    %175 = math.tanh %174 : vector<2x128xf32>
    %176 = arith.mulf %175, %40 : vector<2x128xf32>
    %177 = arith.addf %176, %43 : vector<2x128xf32>
    %178 = vector.extract_strided_slice %177 {offsets = [0, 0], sizes = [2, 32], strides = [1, 1]} : vector<2x128xf32> to vector<2x32xf32>
    %179 = vector.extract_strided_slice %177 {offsets = [0, 32], sizes = [2, 32], strides = [1, 1]} : vector<2x128xf32> to vector<2x32xf32>
    %180 = vector.extract_strided_slice %177 {offsets = [0, 64], sizes = [2, 32], strides = [1, 1]} : vector<2x128xf32> to vector<2x32xf32>
    %181 = vector.extract_strided_slice %177 {offsets = [0, 96], sizes = [2, 32], strides = [1, 1]} : vector<2x128xf32> to vector<2x32xf32>
    %182 = arith.mulf %179, %152 : vector<2x32xf32>
    %183 = arith.mulf %178, %180 : vector<2x32xf32>
    %184 = arith.addf %182, %183 : vector<2x32xf32>
    %185 = math.tanh %184 : vector<2x32xf32>
    %186 = arith.mulf %181, %185 : vector<2x32xf32>
    %c6 = arith.constant 6 : index
    %c0_36 = arith.constant 0 : index
    %187 = vector.load %arg9[%c6, %c0_36] : memref<16x32xf32, #tpu.memory_space<vmem>>, vector<2x32xf32>
    tpu.vector_store %arg9[%c6, %c0_36], %186 {strides = array<i32>} : memref<16x32xf32, #tpu.memory_space<vmem>>, vector<2x32xf32>,
    %188 = vector.extract_strided_slice %49 {offsets = [8, 0], sizes = [2, 128], strides = [1, 1]} : vector<16x128xf32> to vector<2x128xf32>
    %189 = arith.addf %188, %172 : vector<2x128xf32>
    %190 = math.tanh %189 : vector<2x128xf32>
    %191 = arith.mulf %190, %40 : vector<2x128xf32>
    %192 = arith.addf %191, %43 : vector<2x128xf32>
    %193 = vector.extract_strided_slice %192 {offsets = [0, 0], sizes = [2, 32], strides = [1, 1]} : vector<2x128xf32> to vector<2x32xf32>
    %194 = vector.extract_strided_slice %192 {offsets = [0, 32], sizes = [2, 32], strides = [1, 1]} : vector<2x128xf32> to vector<2x32xf32>
    %195 = vector.extract_strided_slice %192 {offsets = [0, 64], sizes = [2, 32], strides = [1, 1]} : vector<2x128xf32> to vector<2x32xf32>
    %196 = vector.extract_strided_slice %192 {offsets = [0, 96], sizes = [2, 32], strides = [1, 1]} : vector<2x128xf32> to vector<2x32xf32>
    %197 = arith.mulf %194, %167 : vector<2x32xf32>
    %198 = arith.mulf %193, %195 : vector<2x32xf32>
    %199 = arith.addf %197, %198 : vector<2x32xf32>
    %200 = math.tanh %199 : vector<2x32xf32>
    %201 = arith.mulf %196, %200 : vector<2x32xf32>
    %202 = tpu.concatenate %201, %186 in 1 : vector<2x32xf32>, vector<2x32xf32> -> vector<2x64xf32>
    %cst_37 = arith.constant dense<0.000000e+00> : vector<2x256xf32>
    %203 = tpu.matmul %202, %51, %cst_37 {dimension_numbers = #tpu.dot_dimension_numbers<[1], [0], [0], [1], [0, 0, 1, 1], [], []>} : vector<2x64xf32>, vector<64x256xf32>, vector<2x256xf32> -> vector<2x256xf32>
    %204 = vector.extract_strided_slice %203 {offsets = [0, 0], sizes = [2, 128], strides = [1, 1]} : vector<2x256xf32> to vector<2x128xf32>
    %205 = vector.extract_strided_slice %203 {offsets = [0, 128], sizes = [2, 128], strides = [1, 1]} : vector<2x256xf32> to vector<2x128xf32>
    %206 = arith.addf %205, %55 : vector<2x128xf32>
    %207 = math.tanh %206 : vector<2x128xf32>
    %208 = arith.mulf %207, %40 : vector<2x128xf32>
    %209 = arith.addf %208, %43 : vector<2x128xf32>
    %210 = vector.extract_strided_slice %209 {offsets = [0, 0], sizes = [2, 32], strides = [1, 1]} : vector<2x128xf32> to vector<2x32xf32>
    %211 = vector.extract_strided_slice %209 {offsets = [0, 32], sizes = [2, 32], strides = [1, 1]} : vector<2x128xf32> to vector<2x32xf32>
    %212 = vector.extract_strided_slice %209 {offsets = [0, 64], sizes = [2, 32], strides = [1, 1]} : vector<2x128xf32> to vector<2x32xf32>
    %213 = vector.extract_strided_slice %209 {offsets = [0, 96], sizes = [2, 32], strides = [1, 1]} : vector<2x128xf32> to vector<2x32xf32>
    %214 = arith.mulf %211, %184 : vector<2x32xf32>
    %215 = arith.mulf %210, %212 : vector<2x32xf32>
    %216 = arith.addf %214, %215 : vector<2x32xf32>
    %217 = math.tanh %216 : vector<2x32xf32>
    %218 = arith.mulf %213, %217 : vector<2x32xf32>
    %c8 = arith.constant 8 : index
    %c0_38 = arith.constant 0 : index
    %219 = vector.load %arg9[%c8, %c0_38] : memref<16x32xf32, #tpu.memory_space<vmem>>, vector<2x32xf32>
    tpu.vector_store %arg9[%c8, %c0_38], %218 {strides = array<i32>} : memref<16x32xf32, #tpu.memory_space<vmem>>, vector<2x32xf32>,
    %220 = vector.extract_strided_slice %49 {offsets = [10, 0], sizes = [2, 128], strides = [1, 1]} : vector<16x128xf32> to vector<2x128xf32>
    %221 = arith.addf %220, %204 : vector<2x128xf32>
    %222 = math.tanh %221 : vector<2x128xf32>
    %223 = arith.mulf %222, %40 : vector<2x128xf32>
    %224 = arith.addf %223, %43 : vector<2x128xf32>
    %225 = vector.extract_strided_slice %224 {offsets = [0, 0], sizes = [2, 32], strides = [1, 1]} : vector<2x128xf32> to vector<2x32xf32>
    %226 = vector.extract_strided_slice %224 {offsets = [0, 32], sizes = [2, 32], strides = [1, 1]} : vector<2x128xf32> to vector<2x32xf32>
    %227 = vector.extract_strided_slice %224 {offsets = [0, 64], sizes = [2, 32], strides = [1, 1]} : vector<2x128xf32> to vector<2x32xf32>
    %228 = vector.extract_strided_slice %224 {offsets = [0, 96], sizes = [2, 32], strides = [1, 1]} : vector<2x128xf32> to vector<2x32xf32>
    %229 = arith.mulf %226, %199 : vector<2x32xf32>
    %230 = arith.mulf %225, %227 : vector<2x32xf32>
    %231 = arith.addf %229, %230 : vector<2x32xf32>
    %232 = math.tanh %231 : vector<2x32xf32>
    %233 = arith.mulf %228, %232 : vector<2x32xf32>
    %234 = tpu.concatenate %233, %218 in 1 : vector<2x32xf32>, vector<2x32xf32> -> vector<2x64xf32>
    %cst_39 = arith.constant dense<0.000000e+00> : vector<2x256xf32>
    %235 = tpu.matmul %234, %51, %cst_39 {dimension_numbers = #tpu.dot_dimension_numbers<[1], [0], [0], [1], [0, 0, 1, 1], [], []>} : vector<2x64xf32>, vector<64x256xf32>, vector<2x256xf32> -> vector<2x256xf32>
    %236 = vector.extract_strided_slice %235 {offsets = [0, 0], sizes = [2, 128], strides = [1, 1]} : vector<2x256xf32> to vector<2x128xf32>
    %237 = vector.extract_strided_slice %235 {offsets = [0, 128], sizes = [2, 128], strides = [1, 1]} : vector<2x256xf32> to vector<2x128xf32>
    %238 = arith.addf %237, %55 : vector<2x128xf32>
    %239 = math.tanh %238 : vector<2x128xf32>
    %240 = arith.mulf %239, %40 : vector<2x128xf32>
    %241 = arith.addf %240, %43 : vector<2x128xf32>
    %242 = vector.extract_strided_slice %241 {offsets = [0, 0], sizes = [2, 32], strides = [1, 1]} : vector<2x128xf32> to vector<2x32xf32>
    %243 = vector.extract_strided_slice %241 {offsets = [0, 32], sizes = [2, 32], strides = [1, 1]} : vector<2x128xf32> to vector<2x32xf32>
    %244 = vector.extract_strided_slice %241 {offsets = [0, 64], sizes = [2, 32], strides = [1, 1]} : vector<2x128xf32> to vector<2x32xf32>
    %245 = vector.extract_strided_slice %241 {offsets = [0, 96], sizes = [2, 32], strides = [1, 1]} : vector<2x128xf32> to vector<2x32xf32>
    %246 = arith.mulf %243, %216 : vector<2x32xf32>
    %247 = arith.mulf %242, %244 : vector<2x32xf32>
    %248 = arith.addf %246, %247 : vector<2x32xf32>
    %249 = math.tanh %248 : vector<2x32xf32>
    %250 = arith.mulf %245, %249 : vector<2x32xf32>
    %c10 = arith.constant 10 : index
    %c0_40 = arith.constant 0 : index
    %251 = vector.load %arg9[%c10, %c0_40] : memref<16x32xf32, #tpu.memory_space<vmem>>, vector<2x32xf32>
    tpu.vector_store %arg9[%c10, %c0_40], %250 {strides = array<i32>} : memref<16x32xf32, #tpu.memory_space<vmem>>, vector<2x32xf32>,
    %252 = vector.extract_strided_slice %49 {offsets = [12, 0], sizes = [2, 128], strides = [1, 1]} : vector<16x128xf32> to vector<2x128xf32>
    %253 = arith.addf %252, %236 : vector<2x128xf32>
    %254 = math.tanh %253 : vector<2x128xf32>
    %255 = arith.mulf %254, %40 : vector<2x128xf32>
    %256 = arith.addf %255, %43 : vector<2x128xf32>
    %257 = vector.extract_strided_slice %256 {offsets = [0, 0], sizes = [2, 32], strides = [1, 1]} : vector<2x128xf32> to vector<2x32xf32>
    %258 = vector.extract_strided_slice %256 {offsets = [0, 32], sizes = [2, 32], strides = [1, 1]} : vector<2x128xf32> to vector<2x32xf32>
    %259 = vector.extract_strided_slice %256 {offsets = [0, 64], sizes = [2, 32], strides = [1, 1]} : vector<2x128xf32> to vector<2x32xf32>
    %260 = vector.extract_strided_slice %256 {offsets = [0, 96], sizes = [2, 32], strides = [1, 1]} : vector<2x128xf32> to vector<2x32xf32>
    %261 = arith.mulf %258, %231 : vector<2x32xf32>
    %262 = arith.mulf %257, %259 : vector<2x32xf32>
    %263 = arith.addf %261, %262 : vector<2x32xf32>
    %264 = math.tanh %263 : vector<2x32xf32>
    %265 = arith.mulf %260, %264 : vector<2x32xf32>
    %266 = tpu.concatenate %265, %250 in 1 : vector<2x32xf32>, vector<2x32xf32> -> vector<2x64xf32>
    %cst_41 = arith.constant dense<0.000000e+00> : vector<2x256xf32>
    %267 = tpu.matmul %266, %51, %cst_41 {dimension_numbers = #tpu.dot_dimension_numbers<[1], [0], [0], [1], [0, 0, 1, 1], [], []>} : vector<2x64xf32>, vector<64x256xf32>, vector<2x256xf32> -> vector<2x256xf32>
    %268 = vector.extract_strided_slice %267 {offsets = [0, 0], sizes = [2, 128], strides = [1, 1]} : vector<2x256xf32> to vector<2x128xf32>
    %269 = vector.extract_strided_slice %267 {offsets = [0, 128], sizes = [2, 128], strides = [1, 1]} : vector<2x256xf32> to vector<2x128xf32>
    %270 = arith.addf %269, %55 : vector<2x128xf32>
    %271 = math.tanh %270 : vector<2x128xf32>
    %272 = arith.mulf %271, %40 : vector<2x128xf32>
    %273 = arith.addf %272, %43 : vector<2x128xf32>
    %274 = vector.extract_strided_slice %273 {offsets = [0, 0], sizes = [2, 32], strides = [1, 1]} : vector<2x128xf32> to vector<2x32xf32>
    %275 = vector.extract_strided_slice %273 {offsets = [0, 32], sizes = [2, 32], strides = [1, 1]} : vector<2x128xf32> to vector<2x32xf32>
    %276 = vector.extract_strided_slice %273 {offsets = [0, 64], sizes = [2, 32], strides = [1, 1]} : vector<2x128xf32> to vector<2x32xf32>
    %277 = vector.extract_strided_slice %273 {offsets = [0, 96], sizes = [2, 32], strides = [1, 1]} : vector<2x128xf32> to vector<2x32xf32>
    %278 = arith.mulf %275, %248 : vector<2x32xf32>
    %279 = arith.mulf %274, %276 : vector<2x32xf32>
    %280 = arith.addf %278, %279 : vector<2x32xf32>
    %281 = math.tanh %280 : vector<2x32xf32>
    %282 = arith.mulf %277, %281 : vector<2x32xf32>
    %c12 = arith.constant 12 : index
    %c0_42 = arith.constant 0 : index
    %283 = vector.load %arg9[%c12, %c0_42] : memref<16x32xf32, #tpu.memory_space<vmem>>, vector<2x32xf32>
    tpu.vector_store %arg9[%c12, %c0_42], %282 {strides = array<i32>} : memref<16x32xf32, #tpu.memory_space<vmem>>, vector<2x32xf32>,
    %284 = vector.extract_strided_slice %49 {offsets = [14, 0], sizes = [2, 128], strides = [1, 1]} : vector<16x128xf32> to vector<2x128xf32>
    %285 = arith.addf %284, %268 : vector<2x128xf32>
    %286 = math.tanh %285 : vector<2x128xf32>
    %287 = arith.mulf %286, %40 : vector<2x128xf32>
    %288 = arith.addf %287, %43 : vector<2x128xf32>
    %289 = vector.extract_strided_slice %288 {offsets = [0, 0], sizes = [2, 32], strides = [1, 1]} : vector<2x128xf32> to vector<2x32xf32>
    %290 = vector.extract_strided_slice %288 {offsets = [0, 32], sizes = [2, 32], strides = [1, 1]} : vector<2x128xf32> to vector<2x32xf32>
    %291 = vector.extract_strided_slice %288 {offsets = [0, 64], sizes = [2, 32], strides = [1, 1]} : vector<2x128xf32> to vector<2x32xf32>
    %292 = vector.extract_strided_slice %288 {offsets = [0, 96], sizes = [2, 32], strides = [1, 1]} : vector<2x128xf32> to vector<2x32xf32>
    %293 = arith.mulf %290, %263 : vector<2x32xf32>
    %294 = arith.mulf %289, %291 : vector<2x32xf32>
    %295 = arith.addf %293, %294 : vector<2x32xf32>
    %296 = math.tanh %295 : vector<2x32xf32>
    %297 = arith.mulf %292, %296 : vector<2x32xf32>
    %298 = tpu.concatenate %297, %282 in 1 : vector<2x32xf32>, vector<2x32xf32> -> vector<2x64xf32>
    %cst_43 = arith.constant dense<0.000000e+00> : vector<2x256xf32>
    %299 = tpu.matmul %298, %51, %cst_43 {dimension_numbers = #tpu.dot_dimension_numbers<[1], [0], [0], [1], [0, 0, 1, 1], [], []>} : vector<2x64xf32>, vector<64x256xf32>, vector<2x256xf32> -> vector<2x256xf32>
    %300 = vector.extract_strided_slice %299 {offsets = [0, 128], sizes = [2, 128], strides = [1, 1]} : vector<2x256xf32> to vector<2x128xf32>
    %301 = arith.addf %300, %55 : vector<2x128xf32>
    %302 = math.tanh %301 : vector<2x128xf32>
    %303 = arith.mulf %302, %40 : vector<2x128xf32>
    %304 = arith.addf %303, %43 : vector<2x128xf32>
    %305 = vector.extract_strided_slice %304 {offsets = [0, 0], sizes = [2, 32], strides = [1, 1]} : vector<2x128xf32> to vector<2x32xf32>
    %306 = vector.extract_strided_slice %304 {offsets = [0, 32], sizes = [2, 32], strides = [1, 1]} : vector<2x128xf32> to vector<2x32xf32>
    %307 = vector.extract_strided_slice %304 {offsets = [0, 64], sizes = [2, 32], strides = [1, 1]} : vector<2x128xf32> to vector<2x32xf32>
    %308 = vector.extract_strided_slice %304 {offsets = [0, 96], sizes = [2, 32], strides = [1, 1]} : vector<2x128xf32> to vector<2x32xf32>
    %309 = arith.mulf %306, %280 : vector<2x32xf32>
    %310 = arith.mulf %305, %307 : vector<2x32xf32>
    %311 = arith.addf %309, %310 : vector<2x32xf32>
    %312 = math.tanh %311 : vector<2x32xf32>
    %313 = arith.mulf %308, %312 : vector<2x32xf32>
    %c14 = arith.constant 14 : index
    %c0_44 = arith.constant 0 : index
    %314 = vector.load %arg9[%c14, %c0_44] : memref<16x32xf32, #tpu.memory_space<vmem>>, vector<2x32xf32>
    tpu.vector_store %arg9[%c14, %c0_44], %313 {strides = array<i32>} : memref<16x32xf32, #tpu.memory_space<vmem>>, vector<2x32xf32>,
    %c0_45 = arith.constant 0 : index
    %c0_46 = arith.constant 0 : index
    %315 = vector.load %arg9[%c0_45, %c0_46] : memref<16x32xf32, #tpu.memory_space<vmem>>, vector<16x32xf32>
    %c0_47 = arith.constant 0 : index
    %c0_48 = arith.constant 0 : index
    %316 = vector.load %arg6[%c0_47, %c0_48] : memref<32x32xf32, #tpu.memory_space<vmem>>, vector<32x32xf32>
    %cst_49 = arith.constant dense<0.000000e+00> : vector<16x32xf32>
    %317 = tpu.matmul %315, %316, %cst_49 {dimension_numbers = #tpu.dot_dimension_numbers<[1], [0], [0], [1], [0, 0, 1, 1], [], []>} : vector<16x32xf32>, vector<32x32xf32>, vector<16x32xf32> -> vector<16x32xf32>
    %c0_50 = arith.constant 0 : index
    %c0_51 = arith.constant 0 : index
    %318 = vector.load %arg7[%c0_50, %c0_51] : memref<1x32xf32, #tpu.memory_space<vmem>>, vector<1x32xf32>
    %319 = vector.broadcast %318 : vector<1x32xf32> to vector<16x32xf32>
    %320 = arith.addf %317, %319 : vector<16x32xf32>
    %c0_52 = arith.constant 0 : index
    %c0_53 = arith.constant 0 : index
    %321 = vector.load %arg8[%c0_52, %c0_53] : memref<16x32xf32, #tpu.memory_space<vmem>>, vector<16x32xf32>
    tpu.vector_store %arg8[%c0_52, %c0_53], %320 {strides = array<i32>} : memref<16x32xf32, #tpu.memory_space<vmem>>, vector<16x32xf32>,
    return
  }
}

</mosaic_0001>

<llo_original>
// kernel: tpu_custom_call.1
$region0: #{tpu_custom_call.1}
  #allocation0 [shape = 'u32[]', space=smem, size = 0x4, offset = 0x4, fixed_abs, tag = 'smem constant byte address 0x4 - core index']
  #allocation1 [shape = 'u32[72,128]{1,0:T(1,128)}', space=vmem, size = 0x9000, scoped, tag = 'internal scratch']
  #allocation2 [shape = 'f32[16,32]{1,0:T(8,128)}', space=vmem, size = 0x2000, scoped, tag = 'scratch operand']
  %s0 = inlined_call_operand.vmem [shape: s32[16,1], index: 0, kind: input, shape index: {}]
  %s1 = inlined_call_operand.hbm [shape: f32[32,32], index: 1, kind: input, shape index: {}]
  %s2 = inlined_call_operand.hbm [shape: f32[32,128], index: 2, kind: input, shape index: {}]
  %s3 = inlined_call_operand.vmem [shape: f32[1,128], index: 3, kind: input, shape index: {}]
  %s4 = inlined_call_operand.hbm [shape: f32[64,256], index: 4, kind: input, shape index: {}]
  %s5 = inlined_call_operand.vmem [shape: f32[1,128], index: 5, kind: input, shape index: {}]
  %s6 = inlined_call_operand.hbm [shape: f32[32,32], index: 6, kind: input, shape index: {}]
  %s7 = inlined_call_operand.vmem [shape: f32[1,32], index: 7, kind: input, shape index: {}]
  %s8 = inlined_call_operand.hbm [shape: f32[16,32], index: 8, kind: output, shape index: {}]
  %s9 = sld [smem:[#allocation0]]
  $region58: #{tpu_custom_call.1} parent=0
    _
  %s11 = ssub.s32 1, %s9
  %s12 = scalar_select 0, %s11, %s9
  $region1: #{tpu_custom_call.1} parent=0
    #allocation3 [shape = 'u8[16384]{0}', space=vmem, size = 0x4000, scoped, tag = 'input window, operand 1, single buffered']
    #allocation4 [shape = 's32[1]{0}', space=sflag, size = 0x4, scoped, tag = 'scoped memory for tpu_custom_call.1']
    #allocation5 [shape = 's32[1]{0}', space=sflag, size = 0x4, scoped, tag = 'scoped memory for tpu_custom_call.1']
    #allocation6 [shape = 'u8[16384]{0}', space=vmem, size = 0x4000, scoped, tag = 'input window, operand 2, single buffered']
    #allocation7 [shape = 's32[1]{0}', space=sflag, size = 0x4, scoped, tag = 'scoped memory for tpu_custom_call.1']
    #allocation8 [shape = 'u8[65536]{0}', space=vmem, size = 0x10000, scoped, tag = 'input window, operand 4, single buffered']
    #allocation9 [shape = 'u8[16384]{0}', space=vmem, size = 0x4000, scoped, tag = 'input window, operand 6, single buffered']
    #allocation10 [shape = 's32[1]{0}', space=sflag, size = 0x4, scoped, tag = 'scoped memory for tpu_custom_call.1']
    #allocation11 [shape = 'u8[8192]{0}', space=vmem, size = 0x2000, scoped, tag = 'output window, operand 0, single buffered']
    %13 = vsyncpa [#allocation4], 0
    %14 = vsyncpa [#allocation7], 0
    %15 = vsyncpa [#allocation10], 0
    %16 = vsyncpa [#allocation5], 0
    // Predicated region
    $region2: #{tpu_custom_call.1} parent=1 // pred_check
      _
    $region3: #{tpu_custom_call.1} parent=1 // pred_check_branch
      %18 = sbr.rel (0) target = $region5
    $region4: #{tpu_custom_call.1} parent=1 // pred_region
      _
    $region5: #{tpu_custom_call.1} parent=1 // pred_fallthru
      _
    // Predicated region
    $region6: #{tpu_custom_call.1} parent=1 // pred_check
      _
    $region7: #{tpu_custom_call.1} parent=1 // pred_check_branch
      %20 = sbr.rel (0) target = $region9
    $region8: #{tpu_custom_call.1} parent=1 // pred_region
      %22 = vsyncadd [#allocation4], 0
      %s23 = sshll.u32 %s1, 4
      %s24 = int_to_ptr.hbm [resolvable:$true] %s23
      %s25 = sshll.u32 [#allocation3], 4
      %s26 = int_to_ptr.vmem [resolvable:$true] %s25
      %31 = dma.hbm_to_vmem [thread:$0]  %s24, 512, %s26, [#allocation4], 128, 128, 8
    $region9: #{tpu_custom_call.1} parent=1 // pred_fallthru
      _
    // Predicated region
    $region10: #{tpu_custom_call.1} parent=1 // pred_check
      _
    $region11: #{tpu_custom_call.1} parent=1 // pred_check_branch
      %33 = sbr.rel (0) target = $region13
    $region12: #{tpu_custom_call.1} parent=1 // pred_region
      %35 = vsyncadd [#allocation7], 0
      %s36 = sshll.u32 %s2, 4
      %s37 = int_to_ptr.hbm [resolvable:$true] %s36
      %s38 = sshll.u32 [#allocation6], 4
      %s39 = int_to_ptr.vmem [resolvable:$true] %s38
      %44 = dma.hbm_to_vmem [thread:$0]  %s37, 512, %s39, [#allocation7], 128, 128, 8
    $region13: #{tpu_custom_call.1} parent=1 // pred_fallthru
      _
    // Predicated region
    $region14: #{tpu_custom_call.1} parent=1 // pred_check
      _
    $region15: #{tpu_custom_call.1} parent=1 // pred_check_branch
      %46 = sbr.rel (0) target = $region17
    $region16: #{tpu_custom_call.1} parent=1 // pred_region
      _
    $region17: #{tpu_custom_call.1} parent=1 // pred_fallthru
      _
    // Predicated region
    $region18: #{tpu_custom_call.1} parent=1 // pred_check
      _
    $region19: #{tpu_custom_call.1} parent=1 // pred_check_branch
      %48 = sbr.rel (0) target = $region21
    $region20: #{tpu_custom_call.1} parent=1 // pred_region
      %50 = vsyncadd [#allocation7], 0
      %s51 = sshll.u32 %s4, 4
      %s52 = int_to_ptr.hbm [resolvable:$true] %s51
      %s53 = sshll.u32 [#allocation8], 4
      %s54 = int_to_ptr.vmem [resolvable:$true] %s53
      %59 = dma.hbm_to_vmem [thread:$0]  %s52, 2048, %s54, [#allocation7], 256, 256, 16
    $region21: #{tpu_custom_call.1} parent=1 // pred_fallthru
      _
    // Predicated region
    $region22: #{tpu_custom_call.1} parent=1 // pred_check
      _
    $region23: #{tpu_custom_call.1} parent=1 // pred_check_branch
      %61 = sbr.rel (0) target = $region25
    $region24: #{tpu_custom_call.1} parent=1 // pred_region
      _
    $region25: #{tpu_custom_call.1} parent=1 // pred_fallthru
      _
    // Predicated region
    $region26: #{tpu_custom_call.1} parent=1 // pred_check
      _
    $region27: #{tpu_custom_call.1} parent=1 // pred_check_branch
      %63 = sbr.rel (0) target = $region29
    $region28: #{tpu_custom_call.1} parent=1 // pred_region
      %65 = vsyncadd [#allocation10], 0
      %s66 = sshll.u32 %s6, 4
      %s67 = int_to_ptr.hbm [resolvable:$true] %s66
      %s68 = sshll.u32 [#allocation9], 4
      %s69 = int_to_ptr.vmem [resolvable:$true] %s68
      %74 = dma.hbm_to_vmem [thread:$0]  %s67, 512, %s69, [#allocation10], 128, 128, 8
    $region29: #{tpu_custom_call.1} parent=1 // pred_fallthru
      _
    // Predicated region
    $region30: #{tpu_custom_call.1} parent=1 // pred_check
      _
    $region31: #{tpu_custom_call.1} parent=1 // pred_check_branch
      %76 = sbr.rel (0) target = $region33
    $region32: #{tpu_custom_call.1} parent=1 // pred_region
      _
    $region33: #{tpu_custom_call.1} parent=1 // pred_fallthru
      _
    // Predicated region
    $region34: #{tpu_custom_call.1} parent=1 // pred_check
      _
    $region35: #{tpu_custom_call.1} parent=1 // pred_check_branch
      %78 = sbr.rel (0) target = $region37
    $region36: #{tpu_custom_call.1} parent=1 // pred_region
      %80 = dma.done [#allocation4], 512
    $region37: #{tpu_custom_call.1} parent=1 // pred_fallthru
      _
    // Predicated region
    $region38: #{tpu_custom_call.1} parent=1 // pred_check
      _
    $region39: #{tpu_custom_call.1} parent=1 // pred_check_branch
      %82 = sbr.rel (0) target = $region41
    $region40: #{tpu_custom_call.1} parent=1 // pred_region
      %84 = dma.done [#allocation7], 512
    $region41: #{tpu_custom_call.1} parent=1 // pred_fallthru
      _
    // Predicated region
    $region42: #{tpu_custom_call.1} parent=1 // pred_check
      _
    $region43: #{tpu_custom_call.1} parent=1 // pred_check_branch
      %86 = sbr.rel (0) target = $region45
    $region44: #{tpu_custom_call.1} parent=1 // pred_region
      %88 = dma.done [#allocation7], 2048
    $region45: #{tpu_custom_call.1} parent=1 // pred_fallthru
      _
    // Predicated region
    $region46: #{tpu_custom_call.1} parent=1 // pred_check
      _
    $region47: #{tpu_custom_call.1} parent=1 // pred_check_branch
      %90 = sbr.rel (0) target = $region49
    $region48: #{tpu_custom_call.1} parent=1 // pred_region
      %92 = dma.done [#allocation10], 512
    $region49: #{tpu_custom_call.1} parent=1 // pred_fallthru
      _
    %v93 = vld [vmem:[%s0] sm:$0xff]
    %v94 = vld [vmem:[%s0 + $0x8] sm:$0xff]
    %v95 = vlaneseq
    %v96 = vand.u32 %v95, 127
    %97 = vset.pattern.permute.xlu0 0
    %98 = vperm.xlu0 %97, %v93
    %v99 = vpop.permute.xlu0 %98
    %100 = vset.pattern.permute.xlu0 0
    %101 = vperm.xlu0 %100, %v94
    %v102 = vpop.permute.xlu0 %101
    %vm103 = vcmp.eq.s32.totalorder %v96, %v99
    %vm104 = vcmp.eq.s32.totalorder %v96, %v102
    %v105 = vsel %vm103, 1, 0
    %v106 = vsel %vm104, 1, 0
    %v107 = vcvt.s32.f32 %v105
    %v108 = vcvt.s32.f32 %v106
    %v109 = vld [vmem:[#allocation3] sm:$0xff]
    %v110 = vld [vmem:[#allocation3 + $0x8] sm:$0xff]
    %v111 = vld [vmem:[#allocation3 + $0x10] sm:$0xff]
    %v112 = vld [vmem:[#allocation3 + $0x18] sm:$0xff]
    %vm113 = vcmask 261120
    %v115 = vsel %vm113, %v107, 0
    %v118 = vsel %vm113, %v108, 0
    %120 = vmatpush.msra.mxu0 0.0
    %121 = vmatpush.msra.mxu0 0.0
    %122 = vmatpush.msra.mxu0 0.0
    %123 = vmatpush.msra.mxu0 0.0
    %124 = vmatpush.msra.mxu0 0.0
    %125 = vmatpush.msra.mxu0 0.0
    %126 = vmatpush.msra.mxu0 0.0
    %127 = vmatpush.msra.mxu0 0.0
    %128 = vmatpush.msra.mxu0 0.0
    %129 = vmatpush.msra.mxu0 0.0
    %130 = vmatpush.msra.mxu0 0.0
    %131 = vmatpush.msra.mxu0 0.0
    %132 = vmatpush.msra.mxu0 %v112
    %133 = vmatpush.msra.mxu0 %v111
    %134 = vmatpush.msra.mxu0 %v110
    %135 = vmatpush.msra.mxu0 %v109
    %136 = vmatmul.f32.gmra.mxu0 %v115
    %v137 = vpop.f32.mrf.mxu0
    %v138 = vadd.f32 0.0, %v137
    %139 = vmatmul.f32.gmra.mxu0 %v118
    %v140 = vpop.f32.mrf.mxu0
    %v141 = vadd.f32 0.0, %v140
    %142 = vdwg.mxu0
    %vm143 = vcmp.ge.s32.totalorder %v96, 64
    %vm144 = vcmp.lt.s32.totalorder %v96, 96
    %vm145 = vmand %vm143, %vm144
    %v146 = vsel %vm145, 1.0, 0.5
    %v147 = vadd.s32 %v96, 128
    %vm148 = vcmp.ge.s32.totalorder %v147, 64
    %vm149 = vcmp.lt.s32.totalorder %v147, 96
    %vm150 = vmand %vm148, %vm149
    %vm151 = vcmp.ge.s32.totalorder %v96, 192
    %vm152 = vcmp.ge.s32.totalorder %v147, 192
    %vm153 = vcmp.lt.s32.totalorder %v96, 224
    %vm154 = vcmp.lt.s32.totalorder %v147, 224
    %vm155 = vmand %vm151, %vm153
    %vm156 = vmand %vm152, %vm154
    %vm157 = vmor %vm145, %vm155
    %vm158 = vmor %vm150, %vm156
    %v159 = vsel %vm157, 1.0, 0.5
    %v160 = vsel %vm158, 1.0, 0.5
    %v161 = vsel %vm145, 0.0, 0.5
    %v162 = vld [vmem:[#allocation6] sm:$0xff]
    %v163 = vld [vmem:[#allocation6 + $0x8] sm:$0xff]
    %v164 = vld [vmem:[#allocation6 + $0x10] sm:$0xff]
    %v165 = vld [vmem:[#allocation6 + $0x18] sm:$0xff]
    %v166 = vld [vmem:[%s3] sm:$0x1]
    %v168 = vperm.slane %v166, 0
    %v171 = vsel %vm113, %v138, 0
    %v174 = vsel %vm113, %v141, 0
    %176 = vmatpush.msra.mxu0 0.0
    %177 = vmatpush.msra.mxu0 0.0
    %178 = vmatpush.msra.mxu0 0.0
    %179 = vmatpush.msra.mxu0 0.0
    %180 = vmatpush.msra.mxu0 0.0
    %181 = vmatpush.msra.mxu0 0.0
    %182 = vmatpush.msra.mxu0 0.0
    %183 = vmatpush.msra.mxu0 0.0
    %184 = vmatpush.msra.mxu0 0.0
    %185 = vmatpush.msra.mxu0 0.0
    %186 = vmatpush.msra.mxu0 0.0
    %187 = vmatpush.msra.mxu0 0.0
    %188 = vmatpush.msra.mxu0 %v165
    %189 = vmatpush.msra.mxu0 %v164
    %190 = vmatpush.msra.mxu0 %v163
    %191 = vmatpush.msra.mxu0 %v162
    %192 = vmatmul.f32.gmra.mxu0 %v171
    %v193 = vpop.f32.mrf.mxu0
    %v194 = vadd.f32 %v168, %v193
    %195 = vmatmul.f32.gmra.mxu0 %v174
    %v196 = vpop.f32.mrf.mxu0
    %v197 = vadd.f32 %v168, %v196
    %198 = vdwg.mxu0
    %v199 = vmul.f32 %v194, %v146
    %v200 = vmul.f32 %v197, %v146
    %v201 = vld [vmem:[#allocation8] sm:$0xff]
    %v202 = vld [vmem:[#allocation8 + $0x8] sm:$0xff]
    %v203 = vld [vmem:[#allocation8 + $0x10] sm:$0xff]
    %v204 = vld [vmem:[#allocation8 + $0x18] sm:$0xff]
    %v205 = vld [vmem:[#allocation8 + $0x20] sm:$0xff]
    %v206 = vld [vmem:[#allocation8 + $0x28] sm:$0xff]
    %v207 = vld [vmem:[#allocation8 + $0x30] sm:$0xff]
    %v208 = vld [vmem:[#allocation8 + $0x38] sm:$0xff]
    %v209 = vld [vmem:[#allocation8 + $0x40] sm:$0xff]
    %v210 = vld [vmem:[#allocation8 + $0x48] sm:$0xff]
    %v211 = vld [vmem:[#allocation8 + $0x50] sm:$0xff]
    %v212 = vld [vmem:[#allocation8 + $0x58] sm:$0xff]
    %v213 = vld [vmem:[#allocation8 + $0x60] sm:$0xff]
    %v214 = vld [vmem:[#allocation8 + $0x68] sm:$0xff]
    %v215 = vld [vmem:[#allocation8 + $0x70] sm:$0xff]
    %v216 = vld [vmem:[#allocation8 + $0x78] sm:$0xff]
    %v217 = vmul.f32 %v201, %v159
    %v218 = vmul.f32 %v202, %v160
    %v219 = vmul.f32 %v203, %v159
    %v220 = vmul.f32 %v204, %v160
    %v221 = vmul.f32 %v205, %v159
    %v222 = vmul.f32 %v206, %v160
    %v223 = vmul.f32 %v207, %v159
    %v224 = vmul.f32 %v208, %v160
    %v225 = vmul.f32 %v209, %v159
    %v226 = vmul.f32 %v210, %v160
    %v227 = vmul.f32 %v211, %v159
    %v228 = vmul.f32 %v212, %v160
    %v229 = vmul.f32 %v213, %v159
    %v230 = vmul.f32 %v214, %v160
    %v231 = vmul.f32 %v215, %v159
    %v232 = vmul.f32 %v216, %v160
    %v233 = vld [vmem:[%s5] sm:$0x1]
    %v235 = vperm.slane %v233, 0
    %v237 = vmul.f32 %v235, %v146
    %v238 = vadd.f32 %v199, 0.0
    %v239 = vtanh.pop %v238
    %v240 = vmul.f32 %v239, %v146
    %v241 = vadd.f32 %v240, %v161
    %v242 = vmul.f32 %v241, 0.0
    %244 = vrot.lane.b32.xlu0 %v241, 64
    %v245 = vpop.permute.xlu0 %244
    %v247 = vmul.f32 %v241, %v245
    %249 = vrot.lane.b32.xlu0 %v247, 32
    %v250 = vpop.permute.xlu0 %249
    %v252 = vadd.f32 %v242, %v250
    %v253 = vtanh.pop %v252
    %255 = vrot.lane.b32.xlu0 %v253, 64
    %v256 = vpop.permute.xlu0 %255
    %v258 = vmul.f32 %v241, %v256
    %260 = vrot.lane.b32.xlu0 %v258, 32
    %v261 = vpop.permute.xlu0 %260
    %v263 = vsel %vm113, %v261, 0.0
    %vm264 = vcmask 523264
    %v266 = vsel %vm264, %v263, 0
    %268 = vmatpush.msra.mxu0 0.0
    %269 = vmatpush.msra.mxu0 0.0
    %270 = vmatpush.msra.mxu0 0.0
    %271 = vmatpush.msra.mxu0 0.0
    %272 = vmatpush.msra.mxu0 0.0
    %273 = vmatpush.msra.mxu0 0.0
    %274 = vmatpush.msra.mxu0 0.0
    %275 = vmatpush.msra.mxu0 0.0
    %276 = vmatpush.msra.mxu0 %v231
    %277 = vmatpush.msra.mxu0 %v229
    %278 = vmatpush.msra.mxu0 %v227
    %279 = vmatpush.msra.mxu0 %v225
    %280 = vmatpush.msra.mxu0 %v223
    %281 = vmatpush.msra.mxu0 %v221
    %282 = vmatpush.msra.mxu0 %v219
    %283 = vmatpush.msra.mxu0 %v217
    %284 = vmatmul.f32.gmra.mxu0 %v266
    %v285 = vpop.f32.mrf.mxu0
    %v286 = vadd.f32 0.0, %v285
    %287 = vdwg.mxu0
    %288 = vmatpush.msra.mxu0 0.0
    %289 = vmatpush.msra.mxu0 0.0
    %290 = vmatpush.msra.mxu0 0.0
    %291 = vmatpush.msra.mxu0 0.0
    %292 = vmatpush.msra.mxu0 0.0
    %293 = vmatpush.msra.mxu0 0.0
    %294 = vmatpush.msra.mxu0 0.0
    %295 = vmatpush.msra.mxu0 0.0
    %296 = vmatpush.msra.mxu0 %v232
    %297 = vmatpush.msra.mxu0 %v230
    %298 = vmatpush.msra.mxu0 %v228
    %299 = vmatpush.msra.mxu0 %v226
    %300 = vmatpush.msra.mxu0 %v224
    %301 = vmatpush.msra.mxu0 %v222
    %302 = vmatpush.msra.mxu0 %v220
    %303 = vmatpush.msra.mxu0 %v218
    %304 = vmatmul.f32.gmra.mxu0 %v266
    %v305 = vpop.f32.mrf.mxu0
    %v306 = vadd.f32 0.0, %v305
    %307 = vdwg.mxu0
    %v308 = vadd.f32 %v306, %v237
    %v309 = vtanh.pop %v308
    %v310 = vmul.f32 %v309, %v146
    %v311 = vadd.f32 %v310, %v161
    %v312 = vmul.f32 %v311, 0.0
    %314 = vrot.lane.b32.xlu0 %v311, 64
    %v315 = vpop.permute.xlu0 %314
    %v317 = vmul.f32 %v311, %v315
    %319 = vrot.lane.b32.xlu0 %v317, 32
    %v320 = vpop.permute.xlu0 %319
    %v322 = vadd.f32 %v312, %v320
    %v323 = vtanh.pop %v322
    %325 = vrot.lane.b32.xlu0 %v323, 64
    %v326 = vpop.permute.xlu0 %325
    %v328 = vmul.f32 %v311, %v326
    %330 = vrot.lane.b32.xlu0 %v328, 32
    %v331 = vpop.permute.xlu0 %330
    %vm333 = vcmask 254976
    %334 = vst.msk [vmem:[#allocation2] sm:$0x3] %vm333, %v331
    %v336 = vrot.slane %v286, 6
    %v338 = vadd.f32 %v199, %v336
    %v339 = vtanh.pop %v338
    %v340 = vmul.f32 %v339, %v146
    %v341 = vadd.f32 %v340, %v161
    %v343 = vrot.slane %v252, 6
    %v345 = vmul.f32 %v341, %v343
    %347 = vrot.lane.b32.xlu0 %v341, 64
    %v348 = vpop.permute.xlu0 %347
    %v350 = vmul.f32 %v341, %v348
    %352 = vrot.lane.b32.xlu0 %v350, 32
    %v353 = vpop.permute.xlu0 %352
    %v355 = vadd.f32 %v345, %v353
    %v356 = vtanh.pop %v355
    %358 = vrot.lane.b32.xlu0 %v356, 64
    %v359 = vpop.permute.xlu0 %358
    %v361 = vmul.f32 %v341, %v359
    %363 = vrot.lane.b32.xlu0 %v361, 32
    %v364 = vpop.permute.xlu0 %363
    %v366 = vrot.slane %v328, 6
    %367 = vrot.lane.b32.xlu0 %v366, 64
    %v368 = vpop.permute.xlu0 %367
    %v370 = vsel %vm113, %v364, %v368
    %v372 = vrot.slane %v370, 2
    %v373 = vsel %vm264, %v372, 0
    %375 = vmatpush.msra.mxu0 0.0
    %376 = vmatpush.msra.mxu0 0.0
    %377 = vmatpush.msra.mxu0 0.0
    %378 = vmatpush.msra.mxu0 0.0
    %379 = vmatpush.msra.mxu0 0.0
    %380 = vmatpush.msra.mxu0 0.0
    %381 = vmatpush.msra.mxu0 0.0
    %382 = vmatpush.msra.mxu0 0.0
    %383 = vmatpush.msra.mxu0 %v231
    %384 = vmatpush.msra.mxu0 %v229
    %385 = vmatpush.msra.mxu0 %v227
    %386 = vmatpush.msra.mxu0 %v225
    %387 = vmatpush.msra.mxu0 %v223
    %388 = vmatpush.msra.mxu0 %v221
    %389 = vmatpush.msra.mxu0 %v219
    %390 = vmatpush.msra.mxu0 %v217
    %391 = vmatmul.f32.gmra.mxu0 %v373
    %v392 = vpop.f32.mrf.mxu0
    %v393 = vadd.f32 0.0, %v392
    %394 = vdwg.mxu0
    %395 = vmatpush.msra.mxu0 0.0
    %396 = vmatpush.msra.mxu0 0.0
    %397 = vmatpush.msra.mxu0 0.0
    %398 = vmatpush.msra.mxu0 0.0
    %399 = vmatpush.msra.mxu0 0.0
    %400 = vmatpush.msra.mxu0 0.0
    %401 = vmatpush.msra.mxu0 0.0
    %402 = vmatpush.msra.mxu0 0.0
    %403 = vmatpush.msra.mxu0 %v232
    %404 = vmatpush.msra.mxu0 %v230
    %405 = vmatpush.msra.mxu0 %v228
    %406 = vmatpush.msra.mxu0 %v226
    %407 = vmatpush.msra.mxu0 %v224
    %408 = vmatpush.msra.mxu0 %v222
    %409 = vmatpush.msra.mxu0 %v220
    %410 = vmatpush.msra.mxu0 %v218
    %411 = vmatmul.f32.gmra.mxu0 %v373
    %v412 = vpop.f32.mrf.mxu0
    %v413 = vadd.f32 0.0, %v412
    %414 = vdwg.mxu0
    %v415 = vadd.f32 %v413, %v237
    %v416 = vtanh.pop %v415
    %v417 = vmul.f32 %v416, %v146
    %v418 = vadd.f32 %v417, %v161
    %v419 = vmul.f32 %v418, %v322
    %421 = vrot.lane.b32.xlu0 %v418, 64
    %v422 = vpop.permute.xlu0 %421
    %v424 = vmul.f32 %v418, %v422
    %426 = vrot.lane.b32.xlu0 %v424, 32
    %v427 = vpop.permute.xlu0 %426
    %v429 = vadd.f32 %v419, %v427
    %v430 = vtanh.pop %v429
    %432 = vrot.lane.b32.xlu0 %v430, 64
    %v433 = vpop.permute.xlu0 %432
    %v435 = vmul.f32 %v418, %v433
    %437 = vrot.lane.b32.xlu0 %v435, 32
    %v438 = vpop.permute.xlu0 %437
    %440 = vst.msk [vmem:[#allocation2 + $0x2] sm:$0x3] %vm333, %v438
    %v442 = vrot.slane %v393, 4
    %v444 = vadd.f32 %v199, %v442
    %v445 = vtanh.pop %v444
    %v446 = vmul.f32 %v445, %v146
    %v447 = vadd.f32 %v446, %v161
    %v449 = vrot.slane %v355, 6
    %v451 = vmul.f32 %v447, %v449
    %453 = vrot.lane.b32.xlu0 %v447, 64
    %v454 = vpop.permute.xlu0 %453
    %v456 = vmul.f32 %v447, %v454
    %458 = vrot.lane.b32.xlu0 %v456, 32
    %v459 = vpop.permute.xlu0 %458
    %v461 = vadd.f32 %v451, %v459
    %v462 = vtanh.pop %v461
    %464 = vrot.lane.b32.xlu0 %v462, 64
    %v465 = vpop.permute.xlu0 %464
    %v467 = vmul.f32 %v447, %v465
    %469 = vrot.lane.b32.xlu0 %v467, 32
    %v470 = vpop.permute.xlu0 %469
    %v472 = vrot.slane %v435, 4
    %473 = vrot.lane.b32.xlu0 %v472, 64
    %v474 = vpop.permute.xlu0 %473
    %v476 = vsel %vm113, %v470, %v474
    %v478 = vrot.slane %v476, 4
    %v479 = vsel %vm264, %v478, 0
    %481 = vmatpush.msra.mxu0 0.0
    %482 = vmatpush.msra.mxu0 0.0
    %483 = vmatpush.msra.mxu0 0.0
    %484 = vmatpush.msra.mxu0 0.0
    %485 = vmatpush.msra.mxu0 0.0
    %486 = vmatpush.msra.mxu0 0.0
    %487 = vmatpush.msra.mxu0 0.0
    %488 = vmatpush.msra.mxu0 0.0
    %489 = vmatpush.msra.mxu0 %v231
    %490 = vmatpush.msra.mxu0 %v229
    %491 = vmatpush.msra.mxu0 %v227
    %492 = vmatpush.msra.mxu0 %v225
    %493 = vmatpush.msra.mxu0 %v223
    %494 = vmatpush.msra.mxu0 %v221
    %495 = vmatpush.msra.mxu0 %v219
    %496 = vmatpush.msra.mxu0 %v217
    %497 = vmatmul.f32.gmra.mxu0 %v479
    %v498 = vpop.f32.mrf.mxu0
    %v499 = vadd.f32 0.0, %v498
    %500 = vdwg.mxu0
    %501 = vmatpush.msra.mxu0 0.0
    %502 = vmatpush.msra.mxu0 0.0
    %503 = vmatpush.msra.mxu0 0.0
    %504 = vmatpush.msra.mxu0 0.0
    %505 = vmatpush.msra.mxu0 0.0
    %506 = vmatpush.msra.mxu0 0.0
    %507 = vmatpush.msra.mxu0 0.0
    %508 = vmatpush.msra.mxu0 0.0
    %509 = vmatpush.msra.mxu0 %v232
    %510 = vmatpush.msra.mxu0 %v230
    %511 = vmatpush.msra.mxu0 %v228
    %512 = vmatpush.msra.mxu0 %v226
    %513 = vmatpush.msra.mxu0 %v224
    %514 = vmatpush.msra.mxu0 %v222
    %515 = vmatpush.msra.mxu0 %v220
    %516 = vmatpush.msra.mxu0 %v218
    %517 = vmatmul.f32.gmra.mxu0 %v479
    %v518 = vpop.f32.mrf.mxu0
    %v519 = vadd.f32 0.0, %v518
    %520 = vdwg.mxu0
    %v521 = vadd.f32 %v519, %v237
    %v522 = vtanh.pop %v521
    %v523 = vmul.f32 %v522, %v146
    %v524 = vadd.f32 %v523, %v161
    %v525 = vmul.f32 %v524, %v429
    %527 = vrot.lane.b32.xlu0 %v524, 64
    %v528 = vpop.permute.xlu0 %527
    %v530 = vmul.f32 %v524, %v528
    %532 = vrot.lane.b32.xlu0 %v530, 32
    %v533 = vpop.permute.xlu0 %532
    %v535 = vadd.f32 %v525, %v533
    %v536 = vtanh.pop %v535
    %538 = vrot.lane.b32.xlu0 %v536, 64
    %v539 = vpop.permute.xlu0 %538
    %v541 = vmul.f32 %v524, %v539
    %543 = vrot.lane.b32.xlu0 %v541, 32
    %v544 = vpop.permute.xlu0 %543
    %546 = vst.msk [vmem:[#allocation2 + $0x4] sm:$0x3] %vm333, %v544
    %v548 = vrot.slane %v499, 2
    %v550 = vadd.f32 %v199, %v548
    %v551 = vtanh.pop %v550
    %v552 = vmul.f32 %v551, %v146
    %v553 = vadd.f32 %v552, %v161
    %v555 = vrot.slane %v461, 6
    %v557 = vmul.f32 %v553, %v555
    %559 = vrot.lane.b32.xlu0 %v553, 64
    %v560 = vpop.permute.xlu0 %559
    %v562 = vmul.f32 %v553, %v560
    %564 = vrot.lane.b32.xlu0 %v562, 32
    %v565 = vpop.permute.xlu0 %564
    %v567 = vadd.f32 %v557, %v565
    %v568 = vtanh.pop %v567
    %570 = vrot.lane.b32.xlu0 %v568, 64
    %v571 = vpop.permute.xlu0 %570
    %v573 = vmul.f32 %v553, %v571
    %575 = vrot.lane.b32.xlu0 %v573, 32
    %v576 = vpop.permute.xlu0 %575
    %v578 = vrot.slane %v541, 2
    %579 = vrot.lane.b32.xlu0 %v578, 64
    %v580 = vpop.permute.xlu0 %579
    %v582 = vsel %vm113, %v576, %v580
    %v584 = vrot.slane %v582, 6
    %v585 = vsel %vm264, %v584, 0
    %587 = vmatpush.msra.mxu0 0.0
    %588 = vmatpush.msra.mxu0 0.0
    %589 = vmatpush.msra.mxu0 0.0
    %590 = vmatpush.msra.mxu0 0.0
    %591 = vmatpush.msra.mxu0 0.0
    %592 = vmatpush.msra.mxu0 0.0
    %593 = vmatpush.msra.mxu0 0.0
    %594 = vmatpush.msra.mxu0 0.0
    %595 = vmatpush.msra.mxu0 %v231
    %596 = vmatpush.msra.mxu0 %v229
    %597 = vmatpush.msra.mxu0 %v227
    %598 = vmatpush.msra.mxu0 %v225
    %599 = vmatpush.msra.mxu0 %v223
    %600 = vmatpush.msra.mxu0 %v221
    %601 = vmatpush.msra.mxu0 %v219
    %602 = vmatpush.msra.mxu0 %v217
    %603 = vmatmul.f32.gmra.mxu0 %v585
    %v604 = vpop.f32.mrf.mxu0
    %v605 = vadd.f32 0.0, %v604
    %606 = vdwg.mxu0
    %607 = vmatpush.msra.mxu0 0.0
    %608 = vmatpush.msra.mxu0 0.0
    %609 = vmatpush.msra.mxu0 0.0
    %610 = vmatpush.msra.mxu0 0.0
    %611 = vmatpush.msra.mxu0 0.0
    %612 = vmatpush.msra.mxu0 0.0
    %613 = vmatpush.msra.mxu0 0.0
    %614 = vmatpush.msra.mxu0 0.0
    %615 = vmatpush.msra.mxu0 %v232
    %616 = vmatpush.msra.mxu0 %v230
    %617 = vmatpush.msra.mxu0 %v228
    %618 = vmatpush.msra.mxu0 %v226
    %619 = vmatpush.msra.mxu0 %v224
    %620 = vmatpush.msra.mxu0 %v222
    %621 = vmatpush.msra.mxu0 %v220
    %622 = vmatpush.msra.mxu0 %v218
    %623 = vmatmul.f32.gmra.mxu0 %v585
    %v624 = vpop.f32.mrf.mxu0
    %v625 = vadd.f32 0.0, %v624
    %626 = vdwg.mxu0
    %v627 = vadd.f32 %v625, %v237
    %v628 = vtanh.pop %v627
    %v629 = vmul.f32 %v628, %v146
    %v630 = vadd.f32 %v629, %v161
    %v631 = vmul.f32 %v630, %v535
    %633 = vrot.lane.b32.xlu0 %v630, 64
    %v634 = vpop.permute.xlu0 %633
    %v636 = vmul.f32 %v630, %v634
    %638 = vrot.lane.b32.xlu0 %v636, 32
    %v639 = vpop.permute.xlu0 %638
    %v641 = vadd.f32 %v631, %v639
    %v642 = vtanh.pop %v641
    %644 = vrot.lane.b32.xlu0 %v642, 64
    %v645 = vpop.permute.xlu0 %644
    %v647 = vmul.f32 %v630, %v645
    %649 = vrot.lane.b32.xlu0 %v647, 32
    %v650 = vpop.permute.xlu0 %649
    %652 = vst.msk [vmem:[#allocation2 + $0x6] sm:$0x3] %vm333, %v650
    %v653 = vadd.f32 %v200, %v605
    %v654 = vtanh.pop %v653
    %v655 = vmul.f32 %v654, %v146
    %v656 = vadd.f32 %v655, %v161
    %v658 = vrot.slane %v567, 6
    %v660 = vmul.f32 %v656, %v658
    %662 = vrot.lane.b32.xlu0 %v656, 64
    %v663 = vpop.permute.xlu0 %662
    %v665 = vmul.f32 %v656, %v663
    %667 = vrot.lane.b32.xlu0 %v665, 32
    %v668 = vpop.permute.xlu0 %667
    %v670 = vadd.f32 %v660, %v668
    %v671 = vtanh.pop %v670
    %673 = vrot.lane.b32.xlu0 %v671, 64
    %v674 = vpop.permute.xlu0 %673
    %v676 = vmul.f32 %v656, %v674
    %678 = vrot.lane.b32.xlu0 %v676, 32
    %v679 = vpop.permute.xlu0 %678
    %681 = vrot.lane.b32.xlu0 %v647, 64
    %v682 = vpop.permute.xlu0 %681
    %v684 = vsel %vm113, %v679, %v682
    %v686 = vsel %vm264, %v684, 0
    %688 = vmatpush.msra.mxu0 0.0
    %689 = vmatpush.msra.mxu0 0.0
    %690 = vmatpush.msra.mxu0 0.0
    %691 = vmatpush.msra.mxu0 0.0
    %692 = vmatpush.msra.mxu0 0.0
    %693 = vmatpush.msra.mxu0 0.0
    %694 = vmatpush.msra.mxu0 0.0
    %695 = vmatpush.msra.mxu0 0.0
    %696 = vmatpush.msra.mxu0 %v231
    %697 = vmatpush.msra.mxu0 %v229
    %698 = vmatpush.msra.mxu0 %v227
    %699 = vmatpush.msra.mxu0 %v225
    %700 = vmatpush.msra.mxu0 %v223
    %701 = vmatpush.msra.mxu0 %v221
    %702 = vmatpush.msra.mxu0 %v219
    %703 = vmatpush.msra.mxu0 %v217
    %704 = vmatmul.f32.gmra.mxu0 %v686
    %v705 = vpop.f32.mrf.mxu0
    %v706 = vadd.f32 0.0, %v705
    %707 = vdwg.mxu0
    %708 = vmatpush.msra.mxu0 0.0
    %709 = vmatpush.msra.mxu0 0.0
    %710 = vmatpush.msra.mxu0 0.0
    %711 = vmatpush.msra.mxu0 0.0
    %712 = vmatpush.msra.mxu0 0.0
    %713 = vmatpush.msra.mxu0 0.0
    %714 = vmatpush.msra.mxu0 0.0
    %715 = vmatpush.msra.mxu0 0.0
    %716 = vmatpush.msra.mxu0 %v232
    %717 = vmatpush.msra.mxu0 %v230
    %718 = vmatpush.msra.mxu0 %v228
    %719 = vmatpush.msra.mxu0 %v226
    %720 = vmatpush.msra.mxu0 %v224
    %721 = vmatpush.msra.mxu0 %v222
    %722 = vmatpush.msra.mxu0 %v220
    %723 = vmatpush.msra.mxu0 %v218
    %724 = vmatmul.f32.gmra.mxu0 %v686
    %v725 = vpop.f32.mrf.mxu0
    %v726 = vadd.f32 0.0, %v725
    %727 = vdwg.mxu0
    %v728 = vadd.f32 %v726, %v237
    %v729 = vtanh.pop %v728
    %v730 = vmul.f32 %v729, %v146
    %v731 = vadd.f32 %v730, %v161
    %v732 = vmul.f32 %v731, %v641
    %734 = vrot.lane.b32.xlu0 %v731, 64
    %v735 = vpop.permute.xlu0 %734
    %v737 = vmul.f32 %v731, %v735
    %739 = vrot.lane.b32.xlu0 %v737, 32
    %v740 = vpop.permute.xlu0 %739
    %v742 = vadd.f32 %v732, %v740
    %v743 = vtanh.pop %v742
    %745 = vrot.lane.b32.xlu0 %v743, 64
    %v746 = vpop.permute.xlu0 %745
    %v748 = vmul.f32 %v731, %v746
    %750 = vrot.lane.b32.xlu0 %v748, 32
    %v751 = vpop.permute.xlu0 %750
    %753 = vst.msk [vmem:[#allocation2 + $0x8] sm:$0x3] %vm333, %v751
    %v755 = vrot.slane %v706, 6
    %v757 = vadd.f32 %v200, %v755
    %v758 = vtanh.pop %v757
    %v759 = vmul.f32 %v758, %v146
    %v760 = vadd.f32 %v759, %v161
    %v762 = vrot.slane %v670, 6
    %v764 = vmul.f32 %v760, %v762
    %766 = vrot.lane.b32.xlu0 %v760, 64
    %v767 = vpop.permute.xlu0 %766
    %v769 = vmul.f32 %v760, %v767
    %771 = vrot.lane.b32.xlu0 %v769, 32
    %v772 = vpop.permute.xlu0 %771
    %v774 = vadd.f32 %v764, %v772
    %v775 = vtanh.pop %v774
    %777 = vrot.lane.b32.xlu0 %v775, 64
    %v778 = vpop.permute.xlu0 %777
    %v780 = vmul.f32 %v760, %v778
    %782 = vrot.lane.b32.xlu0 %v780, 32
    %v783 = vpop.permute.xlu0 %782
    %v785 = vrot.slane %v748, 6
    %786 = vrot.lane.b32.xlu0 %v785, 64
    %v787 = vpop.permute.xlu0 %786
    %v789 = vsel %vm113, %v783, %v787
    %v791 = vrot.slane %v789, 2
    %v792 = vsel %vm264, %v791, 0
    %794 = vmatpush.msra.mxu0 0.0
    %795 = vmatpush.msra.mxu0 0.0
    %796 = vmatpush.msra.mxu0 0.0
    %797 = vmatpush.msra.mxu0 0.0
    %798 = vmatpush.msra.mxu0 0.0
    %799 = vmatpush.msra.mxu0 0.0
    %800 = vmatpush.msra.mxu0 0.0
    %801 = vmatpush.msra.mxu0 0.0
    %802 = vmatpush.msra.mxu0 %v231
    %803 = vmatpush.msra.mxu0 %v229
    %804 = vmatpush.msra.mxu0 %v227
    %805 = vmatpush.msra.mxu0 %v225
    %806 = vmatpush.msra.mxu0 %v223
    %807 = vmatpush.msra.mxu0 %v221
    %808 = vmatpush.msra.mxu0 %v219
    %809 = vmatpush.msra.mxu0 %v217
    %810 = vmatmul.f32.gmra.mxu0 %v792
    %v811 = vpop.f32.mrf.mxu0
    %v812 = vadd.f32 0.0, %v811
    %813 = vdwg.mxu0
    %814 = vmatpush.msra.mxu0 0.0
    %815 = vmatpush.msra.mxu0 0.0
    %816 = vmatpush.msra.mxu0 0.0
    %817 = vmatpush.msra.mxu0 0.0
    %818 = vmatpush.msra.mxu0 0.0
    %819 = vmatpush.msra.mxu0 0.0
    %820 = vmatpush.msra.mxu0 0.0
    %821 = vmatpush.msra.mxu0 0.0
    %822 = vmatpush.msra.mxu0 %v232
    %823 = vmatpush.msra.mxu0 %v230
    %824 = vmatpush.msra.mxu0 %v228
    %825 = vmatpush.msra.mxu0 %v226
    %826 = vmatpush.msra.mxu0 %v224
    %827 = vmatpush.msra.mxu0 %v222
    %828 = vmatpush.msra.mxu0 %v220
    %829 = vmatpush.msra.mxu0 %v218
    %830 = vmatmul.f32.gmra.mxu0 %v792
    %v831 = vpop.f32.mrf.mxu0
    %v832 = vadd.f32 0.0, %v831
    %833 = vdwg.mxu0
    %v834 = vadd.f32 %v832, %v237
    %v835 = vtanh.pop %v834
    %v836 = vmul.f32 %v835, %v146
    %v837 = vadd.f32 %v836, %v161
    %v838 = vmul.f32 %v837, %v742
    %840 = vrot.lane.b32.xlu0 %v837, 64
    %v841 = vpop.permute.xlu0 %840
    %v843 = vmul.f32 %v837, %v841
    %845 = vrot.lane.b32.xlu0 %v843, 32
    %v846 = vpop.permute.xlu0 %845
    %v848 = vadd.f32 %v838, %v846
    %v849 = vtanh.pop %v848
    %851 = vrot.lane.b32.xlu0 %v849, 64
    %v852 = vpop.permute.xlu0 %851
    %v854 = vmul.f32 %v837, %v852
    %856 = vrot.lane.b32.xlu0 %v854, 32
    %v857 = vpop.permute.xlu0 %856
    %859 = vst.msk [vmem:[#allocation2 + $0xa] sm:$0x3] %vm333, %v857
    %v861 = vrot.slane %v812, 4
    %v863 = vadd.f32 %v200, %v861
    %v864 = vtanh.pop %v863
    %v865 = vmul.f32 %v864, %v146
    %v866 = vadd.f32 %v865, %v161
    %v868 = vrot.slane %v774, 6
    %v870 = vmul.f32 %v866, %v868
    %872 = vrot.lane.b32.xlu0 %v866, 64
    %v873 = vpop.permute.xlu0 %872
    %v875 = vmul.f32 %v866, %v873
    %877 = vrot.lane.b32.xlu0 %v875, 32
    %v878 = vpop.permute.xlu0 %877
    %v880 = vadd.f32 %v870, %v878
    %v881 = vtanh.pop %v880
    %883 = vrot.lane.b32.xlu0 %v881, 64
    %v884 = vpop.permute.xlu0 %883
    %v886 = vmul.f32 %v866, %v884
    %888 = vrot.lane.b32.xlu0 %v886, 32
    %v889 = vpop.permute.xlu0 %888
    %v891 = vrot.slane %v854, 4
    %892 = vrot.lane.b32.xlu0 %v891, 64
    %v893 = vpop.permute.xlu0 %892
    %v895 = vsel %vm113, %v889, %v893
    %v897 = vrot.slane %v895, 4
    %v898 = vsel %vm264, %v897, 0
    %900 = vmatpush.msra.mxu0 0.0
    %901 = vmatpush.msra.mxu0 0.0
    %902 = vmatpush.msra.mxu0 0.0
    %903 = vmatpush.msra.mxu0 0.0
    %904 = vmatpush.msra.mxu0 0.0
    %905 = vmatpush.msra.mxu0 0.0
    %906 = vmatpush.msra.mxu0 0.0
    %907 = vmatpush.msra.mxu0 0.0
    %908 = vmatpush.msra.mxu0 %v231
    %909 = vmatpush.msra.mxu0 %v229
    %910 = vmatpush.msra.mxu0 %v227
    %911 = vmatpush.msra.mxu0 %v225
    %912 = vmatpush.msra.mxu0 %v223
    %913 = vmatpush.msra.mxu0 %v221
    %914 = vmatpush.msra.mxu0 %v219
    %915 = vmatpush.msra.mxu0 %v217
    %916 = vmatmul.f32.gmra.mxu0 %v898
    %v917 = vpop.f32.mrf.mxu0
    %v918 = vadd.f32 0.0, %v917
    %919 = vdwg.mxu0
    %920 = vmatpush.msra.mxu0 0.0
    %921 = vmatpush.msra.mxu0 0.0
    %922 = vmatpush.msra.mxu0 0.0
    %923 = vmatpush.msra.mxu0 0.0
    %924 = vmatpush.msra.mxu0 0.0
    %925 = vmatpush.msra.mxu0 0.0
    %926 = vmatpush.msra.mxu0 0.0
    %927 = vmatpush.msra.mxu0 0.0
    %928 = vmatpush.msra.mxu0 %v232
    %929 = vmatpush.msra.mxu0 %v230
    %930 = vmatpush.msra.mxu0 %v228
    %931 = vmatpush.msra.mxu0 %v226
    %932 = vmatpush.msra.mxu0 %v224
    %933 = vmatpush.msra.mxu0 %v222
    %934 = vmatpush.msra.mxu0 %v220
    %935 = vmatpush.msra.mxu0 %v218
    %936 = vmatmul.f32.gmra.mxu0 %v898
    %v937 = vpop.f32.mrf.mxu0
    %v938 = vadd.f32 0.0, %v937
    %939 = vdwg.mxu0
    %v940 = vadd.f32 %v938, %v237
    %v941 = vtanh.pop %v940
    %v942 = vmul.f32 %v941, %v146
    %v943 = vadd.f32 %v942, %v161
    %v944 = vmul.f32 %v943, %v848
    %946 = vrot.lane.b32.xlu0 %v943, 64
    %v947 = vpop.permute.xlu0 %946
    %v949 = vmul.f32 %v943, %v947
    %951 = vrot.lane.b32.xlu0 %v949, 32
    %v952 = vpop.permute.xlu0 %951
    %v954 = vadd.f32 %v944, %v952
    %v955 = vtanh.pop %v954
    %957 = vrot.lane.b32.xlu0 %v955, 64
    %v958 = vpop.permute.xlu0 %957
    %v960 = vmul.f32 %v943, %v958
    %962 = vrot.lane.b32.xlu0 %v960, 32
    %v963 = vpop.permute.xlu0 %962
    %965 = vst.msk [vmem:[#allocation2 + $0xc] sm:$0x3] %vm333, %v963
    %v967 = vrot.slane %v918, 2
    %v969 = vadd.f32 %v200, %v967
    %v970 = vtanh.pop %v969
    %v971 = vmul.f32 %v970, %v146
    %v972 = vadd.f32 %v971, %v161
    %v974 = vrot.slane %v880, 6
    %v976 = vmul.f32 %v972, %v974
    %978 = vrot.lane.b32.xlu0 %v972, 64
    %v979 = vpop.permute.xlu0 %978
    %v981 = vmul.f32 %v972, %v979
    %983 = vrot.lane.b32.xlu0 %v981, 32
    %v984 = vpop.permute.xlu0 %983
    %v986 = vadd.f32 %v976, %v984
    %v987 = vtanh.pop %v986
    %989 = vrot.lane.b32.xlu0 %v987, 64
    %v990 = vpop.permute.xlu0 %989
    %v992 = vmul.f32 %v972, %v990
    %994 = vrot.lane.b32.xlu0 %v992, 32
    %v995 = vpop.permute.xlu0 %994
    %v997 = vrot.slane %v960, 2
    %998 = vrot.lane.b32.xlu0 %v997, 64
    %v999 = vpop.permute.xlu0 %998
    %v1001 = vsel %vm113, %v995, %v999
    %v1003 = vrot.slane %v1001, 6
    %v1004 = vsel %vm264, %v1003, 0
    %1006 = vmatpush.msra.mxu0 0.0
    %1007 = vmatpush.msra.mxu0 0.0
    %1008 = vmatpush.msra.mxu0 0.0
    %1009 = vmatpush.msra.mxu0 0.0
    %1010 = vmatpush.msra.mxu0 0.0
    %1011 = vmatpush.msra.mxu0 0.0
    %1012 = vmatpush.msra.mxu0 0.0
    %1013 = vmatpush.msra.mxu0 0.0
    %1014 = vmatpush.msra.mxu0 %v232
    %1015 = vmatpush.msra.mxu0 %v230
    %1016 = vmatpush.msra.mxu0 %v228
    %1017 = vmatpush.msra.mxu0 %v226
    %1018 = vmatpush.msra.mxu0 %v224
    %1019 = vmatpush.msra.mxu0 %v222
    %1020 = vmatpush.msra.mxu0 %v220
    %1021 = vmatpush.msra.mxu0 %v218
    %1022 = vmatmul.f32.gmra.mxu0 %v1004
    %v1023 = vpop.f32.mrf.mxu0
    %v1024 = vadd.f32 0.0, %v1023
    %1025 = vdwg.mxu0
    %v1026 = vadd.f32 %v1024, %v237
    %v1027 = vtanh.pop %v1026
    %v1028 = vmul.f32 %v1027, %v146
    %v1029 = vadd.f32 %v1028, %v161
    %v1030 = vmul.f32 %v1029, %v954
    %1032 = vrot.lane.b32.xlu0 %v1029, 64
    %v1033 = vpop.permute.xlu0 %1032
    %v1035 = vmul.f32 %v1029, %v1033
    %1037 = vrot.lane.b32.xlu0 %v1035, 32
    %v1038 = vpop.permute.xlu0 %1037
    %v1040 = vadd.f32 %v1030, %v1038
    %v1041 = vtanh.pop %v1040
    %1043 = vrot.lane.b32.xlu0 %v1041, 64
    %v1044 = vpop.permute.xlu0 %1043
    %v1046 = vmul.f32 %v1029, %v1044
    %1048 = vrot.lane.b32.xlu0 %v1046, 32
    %v1049 = vpop.permute.xlu0 %1048
    %1051 = vst.msk [vmem:[#allocation2 + $0xe] sm:$0x3] %vm333, %v1049
    %v1052 = vld [vmem:[#allocation2] sm:$0xff]
    %v1053 = vld [vmem:[#allocation2 + $0x8] sm:$0xff]
    %v1054 = vld [vmem:[#allocation9] sm:$0xff]
    %v1055 = vld [vmem:[#allocation9 + $0x8] sm:$0xff]
    %v1056 = vld [vmem:[#allocation9 + $0x10] sm:$0xff]
    %v1057 = vld [vmem:[#allocation9 + $0x18] sm:$0xff]
    %v1058 = vld [vmem:[%s7] sm:$0x1]
    %v1060 = vperm.slane %v1058, 0
    %v1063 = vsel %vm113, %v1052, 0
    %v1066 = vsel %vm113, %v1053, 0
    %1068 = vmatpush.msra.mxu0 0.0
    %1069 = vmatpush.msra.mxu0 0.0
    %1070 = vmatpush.msra.mxu0 0.0
    %1071 = vmatpush.msra.mxu0 0.0
    %1072 = vmatpush.msra.mxu0 0.0
    %1073 = vmatpush.msra.mxu0 0.0
    %1074 = vmatpush.msra.mxu0 0.0
    %1075 = vmatpush.msra.mxu0 0.0
    %1076 = vmatpush.msra.mxu0 0.0
    %1077 = vmatpush.msra.mxu0 0.0
    %1078 = vmatpush.msra.mxu0 0.0
    %1079 = vmatpush.msra.mxu0 0.0
    %1080 = vmatpush.msra.mxu0 %v1057
    %1081 = vmatpush.msra.mxu0 %v1056
    %1082 = vmatpush.msra.mxu0 %v1055
    %1083 = vmatpush.msra.mxu0 %v1054
    %1084 = vmatmul.f32.gmra.mxu0 %v1063
    %v1085 = vpop.f32.mrf.mxu0
    %v1086 = vadd.f32 %v1060, %v1085
    %1087 = vmatmul.f32.gmra.mxu0 %v1066
    %v1088 = vpop.f32.mrf.mxu0
    %v1089 = vadd.f32 %v1060, %v1088
    %1090 = vdwg.mxu0
    %1091 = vst.msk [vmem:[#allocation11] sm:$0xff] %vm113, %v1086
    %1092 = vst.msk [vmem:[#allocation11 + $0x8] sm:$0xff] %vm113, %v1089
    // Predicated region
    $region50: #{tpu_custom_call.1} parent=1 // pred_check
      _
    $region51: #{tpu_custom_call.1} parent=1 // pred_check_branch
      %1094 = sbr.rel (0) target = $region53
    $region52: #{tpu_custom_call.1} parent=1 // pred_region
      %1096 = vsyncadd [#allocation5], 0
      %s1097 = sshll.u32 [#allocation11], 4
      %s1098 = int_to_ptr.vmem [resolvable:$true] %s1097
      %s1099 = sshll.u32 %s8, 4
      %s1100 = int_to_ptr.hbm [resolvable:$true] %s1099
      %1105 = dma.vmem_to_hbm [thread:$0]  %s1098, 256, %s1100, [#allocation5], 128, 128, 8
    $region53: #{tpu_custom_call.1} parent=1 // pred_fallthru
      _
    // Predicated region
    $region54: #{tpu_custom_call.1} parent=1 // pred_check
      _
    $region55: #{tpu_custom_call.1} parent=1 // pred_check_branch
      %1107 = sbr.rel (0) target = $region57
    $region56: #{tpu_custom_call.1} parent=1 // pred_region
      %1109 = dma.done [#allocation5], 256
    $region57: #{tpu_custom_call.1} parent=1 // pred_fallthru
      _
    %1110 = vsyncpa [#allocation4], 1
    %1111 = vsyncpa [#allocation7], 1
    %1112 = vsyncpa [#allocation10], 1
    %1113 = vsyncpa [#allocation5], 1

</llo_original>
